<compile_context>
chip_gen: v7x
topology: tpu7x:2x2x1
jax: 0.10.0
libtpu: 0.0.40
codegen_flags: <defaults>
</compile_context>

<pallas_src>
import functools

import jax
import jax.numpy as jnp
from jax import lax
from jax.experimental import pallas as pl
from jax.experimental.pallas import tpu as pltpu


def _ealstm_fwd_kernel(x_ref, wih_ref, whh_ref, b_ref, wfc_ref, bfc_ref,
                       out_ref, hn_ref, cn_ref, *, mxu_dtype):
    """One batch tile: hoisted time-major input projection, unrolled
    recurrence, lane-dense h/c stores, VPU final FC."""
    TB, S, I = x_ref.shape
    H = whh_ref.shape[0]

    # Weights loaded (and cast) once; reused every step.
    wih = wih_ref[...].astype(mxu_dtype)
    whh = whh_ref[...].astype(mxu_dtype)

    # ---- prologue: time-major x, single MXU matmul for all steps ----------
    # (TB,S,I) -> (S,TB,I) -> (S*TB, I); per-step slices are contiguous.
    x_tm = jnp.transpose(x_ref[...], (1, 0, 2)).reshape(S * TB, I)
    xw = (jnp.dot(x_tm.astype(mxu_dtype), wih,
                  preferred_element_type=jnp.float32)
          + b_ref[...])                                       # [S*TB, 4H] f32

    h = jnp.zeros((TB, H), jnp.float32)
    c = jnp.zeros((TB, H), jnp.float32)

    # ---- recurrence (S static & small -> full unroll; only h @ W_hh,
    # activations and the state update stay on the serial critical path) ----
    for t in range(S):
        gates = xw[t * TB:(t + 1) * TB, :] + jnp.dot(
            h.astype(mxu_dtype), whh, preferred_element_type=jnp.float32)
        # Full-slab EUP dispatches (EUP slot is otherwise idle); slice after.
        sig = jax.nn.sigmoid(gates)
        tnh = jnp.tanh(gates)
        f = sig[:, 0 * H:1 * H]
        i = sig[:, 1 * H:2 * H]
        o = sig[:, 2 * H:3 * H]
        g = tnh[:, 3 * H:4 * H]
        c = f * c + i * g
        h = o * jnp.tanh(c)
        # Lane-dense output slab: one (TB, S*H) block, written back wide.
        hn_ref[:, t * H:(t + 1) * H] = h
        cn_ref[:, t * H:(t + 1) * H] = c

    # ---- epilogue: dropout(p=0.0) == identity; fc(last_h) on the VPU/XLU --
    out_ref[...] = (jnp.sum(h * wfc_ref[...], axis=-1, keepdims=True)
                    + bfc_ref[...])


@functools.partial(jax.jit, static_argnames=("batch_tile", "mxu_dtype"))
def model_forward(x_d, w_ih, w_hh, bias, w_fc, b_fc, *,
                  batch_tile=None, mxu_dtype=jnp.float32):
    """x_d: [B, S, I] -> (out [B,1], h_n [B,S,H], c_n [B,S,H]).

    batch_tile: rows per grid step (default: whole batch -> grid of 1 on
    single-TC chips). mxu_dtype: operand dtype for the MXU dots (use
    jnp.bfloat16 on v6e/v7x for 2x MXU rate; accumulation stays f32).
    """
    B, S, I = x_d.shape
    H = w_hh.shape[0]
    TB = B if batch_tile is None else batch_tile
    assert B % TB == 0, "batch must be divisible by batch_tile"
    SH = S * H

    bias2d = bias.reshape(1, 4 * H).astype(jnp.float32)
    wfc_row = w_fc.reshape(1, H).astype(jnp.float32)
    bfc2d = b_fc.reshape(1, 1).astype(jnp.float32)

    kernel = functools.partial(_ealstm_fwd_kernel, mxu_dtype=mxu_dtype)

    out, hn_flat, cn_flat = pl.pallas_call(
        kernel,
        out_shape=(
            jax.ShapeDtypeStruct((B, 1), jnp.float32),
            jax.ShapeDtypeStruct((B, SH), jnp.float32),   # lane-dense h_n
            jax.ShapeDtypeStruct((B, SH), jnp.float32),   # lane-dense c_n
        ),
        grid=(B // TB,),
        in_specs=[
            pl.BlockSpec((TB, S, I), lambda b: (b, 0, 0)),      # x (batch tile)
            pl.BlockSpec((I, 4 * H), lambda b: (0, 0)),         # W_ih (resident)
            pl.BlockSpec((H, 4 * H), lambda b: (0, 0)),         # W_hh (resident)
            pl.BlockSpec((1, 4 * H), lambda b: (0, 0)),         # bias
            pl.BlockSpec((1, H), lambda b: (0, 0)),             # W_fc row
            pl.BlockSpec((1, 1), lambda b: (0, 0)),             # b_fc
        ],
        out_specs=(
            pl.BlockSpec((TB, 1), lambda b: (b, 0)),
            pl.BlockSpec((TB, SH), lambda b: (b, 0)),
            pl.BlockSpec((TB, SH), lambda b: (b, 0)),
        ),
        compiler_params=pltpu.CompilerParams(
            dimension_semantics=("parallel",)),
    )(x_d.astype(jnp.float32), w_ih.astype(jnp.float32),
      w_hh.astype(jnp.float32), bias2d, wfc_row, bfc2d)

    # Row-major (B, S*H) and (B, S, H) share a layout: reshape is free.
    return out, hn_flat.reshape(B, S, H), cn_flat.reshape(B, S, H)


def init_params(key, input_size_dyn, hidden_size, initial_forget_bias=5):
    """LSTM: W_ih [I,4H], W_hh [H,4H], bias [4H] (forget chunk preset).
    FC: W_fc [H,1], b_fc [1]."""
    k1, k2, k3, k4 = jax.random.split(key, 4)
    scale = 0.1
    w_ih = scale * jax.random.normal(k1, (input_size_dyn, 4 * hidden_size), jnp.float32)
    w_hh = scale * jax.random.normal(k2, (hidden_size, 4 * hidden_size), jnp.float32)
    bias = jnp.zeros((4 * hidden_size,), jnp.float32)
    bias = bias.at[:hidden_size].set(float(initial_forget_bias))  # forget gate
    w_fc = scale * jax.random.normal(k3, (hidden_size, 1), jnp.float32)
    b_fc = scale * jax.random.normal(k4, (1,), jnp.float32)
    return w_ih, w_hh, bias, w_fc, b_fc


def _reference_forward(x_d, w_ih, w_hh, bias, w_fc, b_fc):
    """Pure-JAX reference (lax.scan) for correctness checking."""
    B, S, I = x_d.shape
    H = w_hh.shape[0]
    hi = lax.Precision.HIGHEST

    def step(carry, x_t):
        h, c = carry
        gates = (jnp.dot(x_t, w_ih, precision=hi)
                 + jnp.dot(h, w_hh, precision=hi) + bias)
        f = jax.nn.sigmoid(gates[:, 0 * H:1 * H])
        i = jax.nn.sigmoid(gates[:, 1 * H:2 * H])
        o = jax.nn.sigmoid(gates[:, 2 * H:3 * H])
        g = jnp.tanh(gates[:, 3 * H:4 * H])
        c = f * c + i * g
        h = o * jnp.tanh(c)
        return (h, c), (h, c)

    x_sm = jnp.transpose(x_d, (1, 0, 2))
    init = (jnp.zeros((B, H), jnp.float32), jnp.zeros((B, H), jnp.float32))
    (_, _), (hs, cs) = lax.scan(step, init, x_sm)
    h_n = jnp.transpose(hs, (1, 0, 2))
    c_n = jnp.transpose(cs, (1, 0, 2))
    out = jnp.dot(h_n[:, -1, :], w_fc, precision=hi) + b_fc
    return out, h_n, c_n


if __name__ == "__main__":
    key = jax.random.PRNGKey(0)
    batch, seq, input_size_dyn, hidden_size = 16, 8, 8, 32

    kx, kp = jax.random.split(key)
    x_d = jax.random.normal(kx, (batch, seq, input_size_dyn), jnp.float32)
    params = init_params(kp, input_size_dyn, hidden_size, initial_forget_bias=5)

    out_r, h_r, c_r = _reference_forward(x_d, *params)

    # 1) Default: whole batch per tile (grid of 1), f32 MXU operands.
    out, h_n, c_n = model_forward(x_d, *params)
    jax.block_until_ready((out, h_n, c_n))
    assert out.shape == (batch, 1)
    assert h_n.shape == (batch, seq, hidden_size)
    assert c_n.shape == (batch, seq, hidden_size)
    assert jnp.allclose(out, out_r, atol=1e-2, rtol=1e-2), "out mismatch"
    assert jnp.allclose(h_n, h_r, atol=1e-2, rtol=1e-2), "h_n mismatch"
    assert jnp.allclose(c_n, c_r, atol=1e-2, rtol=1e-2), "c_n mismatch"

    # 2) Tiled batch (grid > 1, parallel dim -> cross-TC shardable on v7x).
    out2, h_n2, c_n2 = model_forward(x_d, *params, batch_tile=8)
    jax.block_until_ready((out2, h_n2, c_n2))
    assert jnp.allclose(out2, out_r, atol=1e-2, rtol=1e-2), "tiled out mismatch"
    assert jnp.allclose(h_n2, h_r, atol=1e-2, rtol=1e-2), "tiled h_n mismatch"
    assert jnp.allclose(c_n2, c_r, atol=1e-2, rtol=1e-2), "tiled c_n mismatch"

    # 3) bf16 MXU operands (v6e/v7x fast path) — verify it runs & is finite.
    out3, h_n3, c_n3 = model_forward(x_d, *params, mxu_dtype=jnp.bfloat16)
    jax.block_until_ready((out3, h_n3, c_n3))
    assert bool(jnp.all(jnp.isfinite(out3)))
    assert bool(jnp.all(jnp.isfinite(h_n3)))
    assert bool(jnp.all(jnp.isfinite(c_n3)))

    print("KERNEL_OK")
</pallas_src>

<mosaic_0001>
module attributes {stable_mosaic.version = 11 : i64} {
  func.func @_ealstm_fwd_kernel(%arg0: i32, %arg1: memref<16x8x8xf32, #tpu.memory_space<vmem>>, %arg2: memref<8x128xf32, #tpu.memory_space<vmem>>, %arg3: memref<32x128xf32, #tpu.memory_space<vmem>>, %arg4: memref<1x128xf32, #tpu.memory_space<vmem>>, %arg5: memref<1x32xf32, #tpu.memory_space<vmem>>, %arg6: memref<1x1xf32, #tpu.memory_space<vmem>>, %arg7: memref<16x1xf32, #tpu.memory_space<vmem>>, %arg8: memref<16x256xf32, #tpu.memory_space<vmem>>, %arg9: memref<16x256xf32, #tpu.memory_space<vmem>>) attributes {dimension_semantics = [#tpu.dimension_semantics<parallel>], iteration_bounds = array<i64: 1>, scalar_prefetch = 0 : i64, scratch_operands = 0 : i64, tpu.core_type = #tpu.core_type<tc>, window_params = [{transform_indices = @transform_0, window_bounds = array<i64: 16, 8, 8>}, {pipeline_mode = #tpu.pipeline_mode<synchronous>, transform_indices = @transform_1, window_bounds = array<i64: 8, 128>}, {pipeline_mode = #tpu.pipeline_mode<synchronous>, transform_indices = @transform_2, window_bounds = array<i64: 32, 128>}, {pipeline_mode = #tpu.pipeline_mode<synchronous>, transform_indices = @transform_3, window_bounds = array<i64: 1, 128>}, {pipeline_mode = #tpu.pipeline_mode<synchronous>, transform_indices = @transform_4, window_bounds = array<i64: 1, 32>}, {pipeline_mode = #tpu.pipeline_mode<synchronous>, transform_indices = @transform_5, window_bounds = array<i64: 1, 1>}, {transform_indices = @transform_6, window_bounds = array<i64: 16, 1>}, {transform_indices = @transform_7, window_bounds = array<i64: 16, 256>}, {transform_indices = @transform_8, window_bounds = array<i64: 16, 256>}]} {
    %c0 = arith.constant 0 : index
    %c0_0 = arith.constant 0 : index
    %0 = vector.load %arg2[%c0, %c0_0] : memref<8x128xf32, #tpu.memory_space<vmem>>, vector<8x128xf32>
    %c0_1 = arith.constant 0 : index
    %c0_2 = arith.constant 0 : index
    %1 = vector.load %arg3[%c0_1, %c0_2] : memref<32x128xf32, #tpu.memory_space<vmem>>, vector<32x128xf32>
    %c0_3 = arith.constant 0 : index
    %c0_4 = arith.constant 0 : index
    %c0_5 = arith.constant 0 : index
    %2 = vector.load %arg1[%c0_3, %c0_4, %c0_5] : memref<16x8x8xf32, #tpu.memory_space<vmem>>, vector<16x8x8xf32>
    %3 = tpu.transpose %2, [1, 0, 2] : vector<16x8x8xf32> -> vector<8x16x8xf32>
    %4 = vector.shape_cast %3 : vector<8x16x8xf32> to vector<128x8xf32>
    %cst = arith.constant dense<0.000000e+00> : vector<128x128xf32>
    %5 = tpu.matmul %4, %0, %cst {dimension_numbers = #tpu.dot_dimension_numbers<[1], [0], [0], [1], [0, 0, 1, 1], [], []>} : vector<128x8xf32>, vector<8x128xf32>, vector<128x128xf32> -> vector<128x128xf32>
    %c0_6 = arith.constant 0 : index
    %c0_7 = arith.constant 0 : index
    %6 = vector.load %arg4[%c0_6, %c0_7] : memref<1x128xf32, #tpu.memory_space<vmem>>, vector<1x128xf32>
    %7 = vector.broadcast %6 : vector<1x128xf32> to vector<128x128xf32>
    %8 = arith.addf %5, %7 : vector<128x128xf32>
    %cst_8 = arith.constant 0.000000e+00 : f32
    %9 = vector.broadcast %cst_8 : f32 to vector<16x32xf32>
    %cst_9 = arith.constant 0.000000e+00 : f32
    %10 = vector.broadcast %cst_9 : f32 to vector<16x32xf32>
    %11 = vector.extract_strided_slice %8 {offsets = [0, 0], sizes = [16, 128], strides = [1, 1]} : vector<128x128xf32> to vector<16x128xf32>
    %cst_10 = arith.constant dense<0.000000e+00> : vector<16x128xf32>
    %12 = tpu.matmul %9, %1, %cst_10 {dimension_numbers = #tpu.dot_dimension_numbers<[1], [0], [0], [1], [0, 0, 1, 1], [], []>} : vector<16x32xf32>, vector<32x128xf32>, vector<16x128xf32> -> vector<16x128xf32>
    %13 = arith.addf %11, %12 : vector<16x128xf32>
    %14 = arith.negf %13 : vector<16x128xf32>
    %15 = math.exp %14 : vector<16x128xf32>
    %cst_11 = arith.constant 1.000000e+00 : f32
    %16 = vector.broadcast %cst_11 : f32 to vector<16x128xf32>
    %17 = arith.addf %16, %15 : vector<16x128xf32>
    %18 = arith.divf %16, %17 : vector<16x128xf32>
    %19 = math.tanh %13 : vector<16x128xf32>
    %20 = vector.extract_strided_slice %18 {offsets = [0, 0], sizes = [16, 32], strides = [1, 1]} : vector<16x128xf32> to vector<16x32xf32>
    %21 = vector.extract_strided_slice %18 {offsets = [0, 32], sizes = [16, 32], strides = [1, 1]} : vector<16x128xf32> to vector<16x32xf32>
    %22 = vector.extract_strided_slice %18 {offsets = [0, 64], sizes = [16, 32], strides = [1, 1]} : vector<16x128xf32> to vector<16x32xf32>
    %23 = vector.extract_strided_slice %19 {offsets = [0, 96], sizes = [16, 32], strides = [1, 1]} : vector<16x128xf32> to vector<16x32xf32>
    %24 = arith.mulf %20, %10 : vector<16x32xf32>
    %25 = arith.mulf %21, %23 : vector<16x32xf32>
    %26 = arith.addf %24, %25 : vector<16x32xf32>
    %27 = math.tanh %26 : vector<16x32xf32>
    %28 = arith.mulf %22, %27 : vector<16x32xf32>
    %c0_12 = arith.constant 0 : index
    %c0_13 = arith.constant 0 : index
    %29 = vector.load %arg8[%c0_12, %c0_13] : memref<16x256xf32, #tpu.memory_space<vmem>>, vector<16x32xf32>
    tpu.vector_store %arg8[%c0_12, %c0_13], %28 {strides = array<i32>} : memref<16x256xf32, #tpu.memory_space<vmem>>, vector<16x32xf32>,
    %c0_14 = arith.constant 0 : index
    %c0_15 = arith.constant 0 : index
    %30 = vector.load %arg9[%c0_14, %c0_15] : memref<16x256xf32, #tpu.memory_space<vmem>>, vector<16x32xf32>
    tpu.vector_store %arg9[%c0_14, %c0_15], %26 {strides = array<i32>} : memref<16x256xf32, #tpu.memory_space<vmem>>, vector<16x32xf32>,
    %31 = vector.extract_strided_slice %8 {offsets = [16, 0], sizes = [16, 128], strides = [1, 1]} : vector<128x128xf32> to vector<16x128xf32>
    %cst_16 = arith.constant dense<0.000000e+00> : vector<16x128xf32>
    %32 = tpu.matmul %28, %1, %cst_16 {dimension_numbers = #tpu.dot_dimension_numbers<[1], [0], [0], [1], [0, 0, 1, 1], [], []>} : vector<16x32xf32>, vector<32x128xf32>, vector<16x128xf32> -> vector<16x128xf32>
    %33 = arith.addf %31, %32 : vector<16x128xf32>
    %34 = arith.negf %33 : vector<16x128xf32>
    %35 = math.exp %34 : vector<16x128xf32>
    %cst_17 = arith.constant 1.000000e+00 : f32
    %36 = vector.broadcast %cst_17 : f32 to vector<16x128xf32>
    %37 = arith.addf %36, %35 : vector<16x128xf32>
    %38 = arith.divf %36, %37 : vector<16x128xf32>
    %39 = math.tanh %33 : vector<16x128xf32>
    %40 = vector.extract_strided_slice %38 {offsets = [0, 0], sizes = [16, 32], strides = [1, 1]} : vector<16x128xf32> to vector<16x32xf32>
    %41 = vector.extract_strided_slice %38 {offsets = [0, 32], sizes = [16, 32], strides = [1, 1]} : vector<16x128xf32> to vector<16x32xf32>
    %42 = vector.extract_strided_slice %38 {offsets = [0, 64], sizes = [16, 32], strides = [1, 1]} : vector<16x128xf32> to vector<16x32xf32>
    %43 = vector.extract_strided_slice %39 {offsets = [0, 96], sizes = [16, 32], strides = [1, 1]} : vector<16x128xf32> to vector<16x32xf32>
    %44 = arith.mulf %40, %26 : vector<16x32xf32>
    %45 = arith.mulf %41, %43 : vector<16x32xf32>
    %46 = arith.addf %44, %45 : vector<16x32xf32>
    %47 = math.tanh %46 : vector<16x32xf32>
    %48 = arith.mulf %42, %47 : vector<16x32xf32>
    %c0_18 = arith.constant 0 : index
    %c32 = arith.constant 32 : index
    %49 = vector.load %arg8[%c0_18, %c32] : memref<16x256xf32, #tpu.memory_space<vmem>>, vector<16x32xf32>
    tpu.vector_store %arg8[%c0_18, %c32], %48 {strides = array<i32>} : memref<16x256xf32, #tpu.memory_space<vmem>>, vector<16x32xf32>,
    %c0_19 = arith.constant 0 : index
    %c32_20 = arith.constant 32 : index
    %50 = vector.load %arg9[%c0_19, %c32_20] : memref<16x256xf32, #tpu.memory_space<vmem>>, vector<16x32xf32>
    tpu.vector_store %arg9[%c0_19, %c32_20], %46 {strides = array<i32>} : memref<16x256xf32, #tpu.memory_space<vmem>>, vector<16x32xf32>,
    %51 = vector.extract_strided_slice %8 {offsets = [32, 0], sizes = [16, 128], strides = [1, 1]} : vector<128x128xf32> to vector<16x128xf32>
    %cst_21 = arith.constant dense<0.000000e+00> : vector<16x128xf32>
    %52 = tpu.matmul %48, %1, %cst_21 {dimension_numbers = #tpu.dot_dimension_numbers<[1], [0], [0], [1], [0, 0, 1, 1], [], []>} : vector<16x32xf32>, vector<32x128xf32>, vector<16x128xf32> -> vector<16x128xf32>
    %53 = arith.addf %51, %52 : vector<16x128xf32>
    %54 = arith.negf %53 : vector<16x128xf32>
    %55 = math.exp %54 : vector<16x128xf32>
    %cst_22 = arith.constant 1.000000e+00 : f32
    %56 = vector.broadcast %cst_22 : f32 to vector<16x128xf32>
    %57 = arith.addf %56, %55 : vector<16x128xf32>
    %58 = arith.divf %56, %57 : vector<16x128xf32>
    %59 = math.tanh %53 : vector<16x128xf32>
    %60 = vector.extract_strided_slice %58 {offsets = [0, 0], sizes = [16, 32], strides = [1, 1]} : vector<16x128xf32> to vector<16x32xf32>
    %61 = vector.extract_strided_slice %58 {offsets = [0, 32], sizes = [16, 32], strides = [1, 1]} : vector<16x128xf32> to vector<16x32xf32>
    %62 = vector.extract_strided_slice %58 {offsets = [0, 64], sizes = [16, 32], strides = [1, 1]} : vector<16x128xf32> to vector<16x32xf32>
    %63 = vector.extract_strided_slice %59 {offsets = [0, 96], sizes = [16, 32], strides = [1, 1]} : vector<16x128xf32> to vector<16x32xf32>
    %64 = arith.mulf %60, %46 : vector<16x32xf32>
    %65 = arith.mulf %61, %63 : vector<16x32xf32>
    %66 = arith.addf %64, %65 : vector<16x32xf32>
    %67 = math.tanh %66 : vector<16x32xf32>
    %68 = arith.mulf %62, %67 : vector<16x32xf32>
    %c0_23 = arith.constant 0 : index
    %c64 = arith.constant 64 : index
    %69 = vector.load %arg8[%c0_23, %c64] : memref<16x256xf32, #tpu.memory_space<vmem>>, vector<16x32xf32>
    tpu.vector_store %arg8[%c0_23, %c64], %68 {strides = array<i32>} : memref<16x256xf32, #tpu.memory_space<vmem>>, vector<16x32xf32>,
    %c0_24 = arith.constant 0 : index
    %c64_25 = arith.constant 64 : index
    %70 = vector.load %arg9[%c0_24, %c64_25] : memref<16x256xf32, #tpu.memory_space<vmem>>, vector<16x32xf32>
    tpu.vector_store %arg9[%c0_24, %c64_25], %66 {strides = array<i32>} : memref<16x256xf32, #tpu.memory_space<vmem>>, vector<16x32xf32>,
    %71 = vector.extract_strided_slice %8 {offsets = [48, 0], sizes = [16, 128], strides = [1, 1]} : vector<128x128xf32> to vector<16x128xf32>
    %cst_26 = arith.constant dense<0.000000e+00> : vector<16x128xf32>
    %72 = tpu.matmul %68, %1, %cst_26 {dimension_numbers = #tpu.dot_dimension_numbers<[1], [0], [0], [1], [0, 0, 1, 1], [], []>} : vector<16x32xf32>, vector<32x128xf32>, vector<16x128xf32> -> vector<16x128xf32>
    %73 = arith.addf %71, %72 : vector<16x128xf32>
    %74 = arith.negf %73 : vector<16x128xf32>
    %75 = math.exp %74 : vector<16x128xf32>
    %cst_27 = arith.constant 1.000000e+00 : f32
    %76 = vector.broadcast %cst_27 : f32 to vector<16x128xf32>
    %77 = arith.addf %76, %75 : vector<16x128xf32>
    %78 = arith.divf %76, %77 : vector<16x128xf32>
    %79 = math.tanh %73 : vector<16x128xf32>
    %80 = vector.extract_strided_slice %78 {offsets = [0, 0], sizes = [16, 32], strides = [1, 1]} : vector<16x128xf32> to vector<16x32xf32>
    %81 = vector.extract_strided_slice %78 {offsets = [0, 32], sizes = [16, 32], strides = [1, 1]} : vector<16x128xf32> to vector<16x32xf32>
    %82 = vector.extract_strided_slice %78 {offsets = [0, 64], sizes = [16, 32], strides = [1, 1]} : vector<16x128xf32> to vector<16x32xf32>
    %83 = vector.extract_strided_slice %79 {offsets = [0, 96], sizes = [16, 32], strides = [1, 1]} : vector<16x128xf32> to vector<16x32xf32>
    %84 = arith.mulf %80, %66 : vector<16x32xf32>
    %85 = arith.mulf %81, %83 : vector<16x32xf32>
    %86 = arith.addf %84, %85 : vector<16x32xf32>
    %87 = math.tanh %86 : vector<16x32xf32>
    %88 = arith.mulf %82, %87 : vector<16x32xf32>
    %c0_28 = arith.constant 0 : index
    %c96 = arith.constant 96 : index
    %89 = vector.load %arg8[%c0_28, %c96] : memref<16x256xf32, #tpu.memory_space<vmem>>, vector<16x32xf32>
    tpu.vector_store %arg8[%c0_28, %c96], %88 {strides = array<i32>} : memref<16x256xf32, #tpu.memory_space<vmem>>, vector<16x32xf32>,
    %c0_29 = arith.constant 0 : index
    %c96_30 = arith.constant 96 : index
    %90 = vector.load %arg9[%c0_29, %c96_30] : memref<16x256xf32, #tpu.memory_space<vmem>>, vector<16x32xf32>
    tpu.vector_store %arg9[%c0_29, %c96_30], %86 {strides = array<i32>} : memref<16x256xf32, #tpu.memory_space<vmem>>, vector<16x32xf32>,
    %91 = vector.extract_strided_slice %8 {offsets = [64, 0], sizes = [16, 128], strides = [1, 1]} : vector<128x128xf32> to vector<16x128xf32>
    %cst_31 = arith.constant dense<0.000000e+00> : vector<16x128xf32>
    %92 = tpu.matmul %88, %1, %cst_31 {dimension_numbers = #tpu.dot_dimension_numbers<[1], [0], [0], [1], [0, 0, 1, 1], [], []>} : vector<16x32xf32>, vector<32x128xf32>, vector<16x128xf32> -> vector<16x128xf32>
    %93 = arith.addf %91, %92 : vector<16x128xf32>
    %94 = arith.negf %93 : vector<16x128xf32>
    %95 = math.exp %94 : vector<16x128xf32>
    %cst_32 = arith.constant 1.000000e+00 : f32
    %96 = vector.broadcast %cst_32 : f32 to vector<16x128xf32>
    %97 = arith.addf %96, %95 : vector<16x128xf32>
    %98 = arith.divf %96, %97 : vector<16x128xf32>
    %99 = math.tanh %93 : vector<16x128xf32>
    %100 = vector.extract_strided_slice %98 {offsets = [0, 0], sizes = [16, 32], strides = [1, 1]} : vector<16x128xf32> to vector<16x32xf32>
    %101 = vector.extract_strided_slice %98 {offsets = [0, 32], sizes = [16, 32], strides = [1, 1]} : vector<16x128xf32> to vector<16x32xf32>
    %102 = vector.extract_strided_slice %98 {offsets = [0, 64], sizes = [16, 32], strides = [1, 1]} : vector<16x128xf32> to vector<16x32xf32>
    %103 = vector.extract_strided_slice %99 {offsets = [0, 96], sizes = [16, 32], strides = [1, 1]} : vector<16x128xf32> to vector<16x32xf32>
    %104 = arith.mulf %100, %86 : vector<16x32xf32>
    %105 = arith.mulf %101, %103 : vector<16x32xf32>
    %106 = arith.addf %104, %105 : vector<16x32xf32>
    %107 = math.tanh %106 : vector<16x32xf32>
    %108 = arith.mulf %102, %107 : vector<16x32xf32>
    %c0_33 = arith.constant 0 : index
    %c128 = arith.constant 128 : index
    %109 = vector.load %arg8[%c0_33, %c128] : memref<16x256xf32, #tpu.memory_space<vmem>>, vector<16x32xf32>
    tpu.vector_store %arg8[%c0_33, %c128], %108 {strides = array<i32>} : memref<16x256xf32, #tpu.memory_space<vmem>>, vector<16x32xf32>,
    %c0_34 = arith.constant 0 : index
    %c128_35 = arith.constant 128 : index
    %110 = vector.load %arg9[%c0_34, %c128_35] : memref<16x256xf32, #tpu.memory_space<vmem>>, vector<16x32xf32>
    tpu.vector_store %arg9[%c0_34, %c128_35], %106 {strides = array<i32>} : memref<16x256xf32, #tpu.memory_space<vmem>>, vector<16x32xf32>,
    %111 = vector.extract_strided_slice %8 {offsets = [80, 0], sizes = [16, 128], strides = [1, 1]} : vector<128x128xf32> to vector<16x128xf32>
    %cst_36 = arith.constant dense<0.000000e+00> : vector<16x128xf32>
    %112 = tpu.matmul %108, %1, %cst_36 {dimension_numbers = #tpu.dot_dimension_numbers<[1], [0], [0], [1], [0, 0, 1, 1], [], []>} : vector<16x32xf32>, vector<32x128xf32>, vector<16x128xf32> -> vector<16x128xf32>
    %113 = arith.addf %111, %112 : vector<16x128xf32>
    %114 = arith.negf %113 : vector<16x128xf32>
    %115 = math.exp %114 : vector<16x128xf32>
    %cst_37 = arith.constant 1.000000e+00 : f32
    %116 = vector.broadcast %cst_37 : f32 to vector<16x128xf32>
    %117 = arith.addf %116, %115 : vector<16x128xf32>
    %118 = arith.divf %116, %117 : vector<16x128xf32>
    %119 = math.tanh %113 : vector<16x128xf32>
    %120 = vector.extract_strided_slice %118 {offsets = [0, 0], sizes = [16, 32], strides = [1, 1]} : vector<16x128xf32> to vector<16x32xf32>
    %121 = vector.extract_strided_slice %118 {offsets = [0, 32], sizes = [16, 32], strides = [1, 1]} : vector<16x128xf32> to vector<16x32xf32>
    %122 = vector.extract_strided_slice %118 {offsets = [0, 64], sizes = [16, 32], strides = [1, 1]} : vector<16x128xf32> to vector<16x32xf32>
    %123 = vector.extract_strided_slice %119 {offsets = [0, 96], sizes = [16, 32], strides = [1, 1]} : vector<16x128xf32> to vector<16x32xf32>
    %124 = arith.mulf %120, %106 : vector<16x32xf32>
    %125 = arith.mulf %121, %123 : vector<16x32xf32>
    %126 = arith.addf %124, %125 : vector<16x32xf32>
    %127 = math.tanh %126 : vector<16x32xf32>
    %128 = arith.mulf %122, %127 : vector<16x32xf32>
    %c0_38 = arith.constant 0 : index
    %c160 = arith.constant 160 : index
    %129 = vector.load %arg8[%c0_38, %c160] : memref<16x256xf32, #tpu.memory_space<vmem>>, vector<16x32xf32>
    tpu.vector_store %arg8[%c0_38, %c160], %128 {strides = array<i32>} : memref<16x256xf32, #tpu.memory_space<vmem>>, vector<16x32xf32>,
    %c0_39 = arith.constant 0 : index
    %c160_40 = arith.constant 160 : index
    %130 = vector.load %arg9[%c0_39, %c160_40] : memref<16x256xf32, #tpu.memory_space<vmem>>, vector<16x32xf32>
    tpu.vector_store %arg9[%c0_39, %c160_40], %126 {strides = array<i32>} : memref<16x256xf32, #tpu.memory_space<vmem>>, vector<16x32xf32>,
    %131 = vector.extract_strided_slice %8 {offsets = [96, 0], sizes = [16, 128], strides = [1, 1]} : vector<128x128xf32> to vector<16x128xf32>
    %cst_41 = arith.constant dense<0.000000e+00> : vector<16x128xf32>
    %132 = tpu.matmul %128, %1, %cst_41 {dimension_numbers = #tpu.dot_dimension_numbers<[1], [0], [0], [1], [0, 0, 1, 1], [], []>} : vector<16x32xf32>, vector<32x128xf32>, vector<16x128xf32> -> vector<16x128xf32>
    %133 = arith.addf %131, %132 : vector<16x128xf32>
    %134 = arith.negf %133 : vector<16x128xf32>
    %135 = math.exp %134 : vector<16x128xf32>
    %cst_42 = arith.constant 1.000000e+00 : f32
    %136 = vector.broadcast %cst_42 : f32 to vector<16x128xf32>
    %137 = arith.addf %136, %135 : vector<16x128xf32>
    %138 = arith.divf %136, %137 : vector<16x128xf32>
    %139 = math.tanh %133 : vector<16x128xf32>
    %140 = vector.extract_strided_slice %138 {offsets = [0, 0], sizes = [16, 32], strides = [1, 1]} : vector<16x128xf32> to vector<16x32xf32>
    %141 = vector.extract_strided_slice %138 {offsets = [0, 32], sizes = [16, 32], strides = [1, 1]} : vector<16x128xf32> to vector<16x32xf32>
    %142 = vector.extract_strided_slice %138 {offsets = [0, 64], sizes = [16, 32], strides = [1, 1]} : vector<16x128xf32> to vector<16x32xf32>
    %143 = vector.extract_strided_slice %139 {offsets = [0, 96], sizes = [16, 32], strides = [1, 1]} : vector<16x128xf32> to vector<16x32xf32>
    %144 = arith.mulf %140, %126 : vector<16x32xf32>
    %145 = arith.mulf %141, %143 : vector<16x32xf32>
    %146 = arith.addf %144, %145 : vector<16x32xf32>
    %147 = math.tanh %146 : vector<16x32xf32>
    %148 = arith.mulf %142, %147 : vector<16x32xf32>
    %c0_43 = arith.constant 0 : index
    %c192 = arith.constant 192 : index
    %149 = vector.load %arg8[%c0_43, %c192] : memref<16x256xf32, #tpu.memory_space<vmem>>, vector<16x32xf32>
    tpu.vector_store %arg8[%c0_43, %c192], %148 {strides = array<i32>} : memref<16x256xf32, #tpu.memory_space<vmem>>, vector<16x32xf32>,
    %c0_44 = arith.constant 0 : index
    %c192_45 = arith.constant 192 : index
    %150 = vector.load %arg9[%c0_44, %c192_45] : memref<16x256xf32, #tpu.memory_space<vmem>>, vector<16x32xf32>
    tpu.vector_store %arg9[%c0_44, %c192_45], %146 {strides = array<i32>} : memref<16x256xf32, #tpu.memory_space<vmem>>, vector<16x32xf32>,
    %151 = vector.extract_strided_slice %8 {offsets = [112, 0], sizes = [16, 128], strides = [1, 1]} : vector<128x128xf32> to vector<16x128xf32>
    %cst_46 = arith.constant dense<0.000000e+00> : vector<16x128xf32>
    %152 = tpu.matmul %148, %1, %cst_46 {dimension_numbers = #tpu.dot_dimension_numbers<[1], [0], [0], [1], [0, 0, 1, 1], [], []>} : vector<16x32xf32>, vector<32x128xf32>, vector<16x128xf32> -> vector<16x128xf32>
    %153 = arith.addf %151, %152 : vector<16x128xf32>
    %154 = arith.negf %153 : vector<16x128xf32>
    %155 = math.exp %154 : vector<16x128xf32>
    %cst_47 = arith.constant 1.000000e+00 : f32
    %156 = vector.broadcast %cst_47 : f32 to vector<16x128xf32>
    %157 = arith.addf %156, %155 : vector<16x128xf32>
    %158 = arith.divf %156, %157 : vector<16x128xf32>
    %159 = math.tanh %153 : vector<16x128xf32>
    %160 = vector.extract_strided_slice %158 {offsets = [0, 0], sizes = [16, 32], strides = [1, 1]} : vector<16x128xf32> to vector<16x32xf32>
    %161 = vector.extract_strided_slice %158 {offsets = [0, 32], sizes = [16, 32], strides = [1, 1]} : vector<16x128xf32> to vector<16x32xf32>
    %162 = vector.extract_strided_slice %158 {offsets = [0, 64], sizes = [16, 32], strides = [1, 1]} : vector<16x128xf32> to vector<16x32xf32>
    %163 = vector.extract_strided_slice %159 {offsets = [0, 96], sizes = [16, 32], strides = [1, 1]} : vector<16x128xf32> to vector<16x32xf32>
    %164 = arith.mulf %160, %146 : vector<16x32xf32>
    %165 = arith.mulf %161, %163 : vector<16x32xf32>
    %166 = arith.addf %164, %165 : vector<16x32xf32>
    %167 = math.tanh %166 : vector<16x32xf32>
    %168 = arith.mulf %162, %167 : vector<16x32xf32>
    %c0_48 = arith.constant 0 : index
    %c224 = arith.constant 224 : index
    %169 = vector.load %arg8[%c0_48, %c224] : memref<16x256xf32, #tpu.memory_space<vmem>>, vector<16x32xf32>
    tpu.vector_store %arg8[%c0_48, %c224], %168 {strides = array<i32>} : memref<16x256xf32, #tpu.memory_space<vmem>>, vector<16x32xf32>,
    %c0_49 = arith.constant 0 : index
    %c224_50 = arith.constant 224 : index
    %170 = vector.load %arg9[%c0_49, %c224_50] : memref<16x256xf32, #tpu.memory_space<vmem>>, vector<16x32xf32>
    tpu.vector_store %arg9[%c0_49, %c224_50], %166 {strides = array<i32>} : memref<16x256xf32, #tpu.memory_space<vmem>>, vector<16x32xf32>,
    %c0_51 = arith.constant 0 : index
    %c0_52 = arith.constant 0 : index
    %171 = vector.load %arg5[%c0_51, %c0_52] : memref<1x32xf32, #tpu.memory_space<vmem>>, vector<1x32xf32>
    %172 = vector.broadcast %171 : vector<1x32xf32> to vector<16x32xf32>
    %173 = arith.mulf %168, %172 : vector<16x32xf32>
    %cst_53 = arith.constant dense<0.000000e+00> : vector<16xf32>
    %174 = vector.multi_reduction <add>, %173, %cst_53 [1] : vector<16x32xf32> to vector<16xf32>
    %175 = vector.shape_cast %174 : vector<16xf32> to vector<16x1xf32>
    %c0_54 = arith.constant 0 : index
    %c0_55 = arith.constant 0 : index
    %176 = vector.load %arg6[%c0_54, %c0_55] : memref<1x1xf32, #tpu.memory_space<vmem>>, vector<1x1xf32>
    %177 = vector.broadcast %176 : vector<1x1xf32> to vector<16x1xf32>
    %178 = arith.addf %175, %177 : vector<16x1xf32>
    %c0_56 = arith.constant 0 : index
    %c0_57 = arith.constant 0 : index
    %179 = vector.load %arg7[%c0_56, %c0_57] : memref<16x1xf32, #tpu.memory_space<vmem>>, vector<16x1xf32>
    tpu.vector_store %arg7[%c0_56, %c0_57], %178 {strides = array<i32>} : memref<16x1xf32, #tpu.memory_space<vmem>>, vector<16x1xf32>,
    return
  }
  func.func @transform_0(%arg0: i32) -> (i32, i32, i32) {
    %c0_i32 = arith.constant 0 : i32
    %c0_i32_0 = arith.constant 0 : i32
    %c0_i32_1 = arith.constant 0 : i32
    return %arg0, %c0_i32, %c0_i32_0 : i32, i32, i32
  }
  func.func @transform_1(%arg0: i32) -> (i32, i32) {
    %c0_i32 = arith.constant 0 : i32
    %c0_i32_0 = arith.constant 0 : i32
    %c0_i32_1 = arith.constant 0 : i32
    return %c0_i32, %c0_i32_0 : i32, i32
  }
  func.func @transform_2(%arg0: i32) -> (i32, i32) {
    %c0_i32 = arith.constant 0 : i32
    %c0_i32_0 = arith.constant 0 : i32
    %c0_i32_1 = arith.constant 0 : i32
    return %c0_i32, %c0_i32_0 : i32, i32
  }
  func.func @transform_3(%arg0: i32) -> (i32, i32) {
    %c0_i32 = arith.constant 0 : i32
    %c0_i32_0 = arith.constant 0 : i32
    %c0_i32_1 = arith.constant 0 : i32
    return %c0_i32, %c0_i32_0 : i32, i32
  }
  func.func @transform_4(%arg0: i32) -> (i32, i32) {
    %c0_i32 = arith.constant 0 : i32
    %c0_i32_0 = arith.constant 0 : i32
    %c0_i32_1 = arith.constant 0 : i32
    return %c0_i32, %c0_i32_0 : i32, i32
  }
  func.func @transform_5(%arg0: i32) -> (i32, i32) {
    %c0_i32 = arith.constant 0 : i32
    %c0_i32_0 = arith.constant 0 : i32
    %c0_i32_1 = arith.constant 0 : i32
    return %c0_i32, %c0_i32_0 : i32, i32
  }
  func.func @transform_6(%arg0: i32) -> (i32, i32) {
    %c0_i32 = arith.constant 0 : i32
    %c0_i32_0 = arith.constant 0 : i32
    return %arg0, %c0_i32 : i32, i32
  }
  func.func @transform_7(%arg0: i32) -> (i32, i32) {
    %c0_i32 = arith.constant 0 : i32
    %c0_i32_0 = arith.constant 0 : i32
    return %arg0, %c0_i32 : i32, i32
  }
  func.func @transform_8(%arg0: i32) -> (i32, i32) {
    %c0_i32 = arith.constant 0 : i32
    %c0_i32_0 = arith.constant 0 : i32
    return %arg0, %c0_i32 : i32, i32
  }
}

</mosaic_0001>

<llo_original>
// kernel: model_forward.1
$region0: #{model_forward.1}
  #allocation0 [shape = 'u32[]', space=smem, size = 0x4, offset = 0x4, fixed_abs, tag = 'smem constant byte address 0x4 - core index']
  #allocation1 [shape = 'u32[144,128]{1,0:T(1,128)}', space=vmem, size = 0x12000, scoped, tag = 'internal scratch']
  #allocation2 [shape = 'f32[1,1]{1,0:T(1,128)S(1)}', space=vmem, size = 0x200, scoped, tag = 'scoped memory for model_forward.1']
  %s0 = inlined_call_operand.vmem [shape: f32[16,8,8], index: 0, kind: input, shape index: {}]
  %s1 = inlined_call_operand.vmem [shape: f32[8,128], index: 1, kind: input, shape index: {}]
  %s2 = inlined_call_operand.vmem [shape: f32[32,128], index: 2, kind: input, shape index: {}]
  %s3 = inlined_call_operand.vmem [shape: f32[1,128], index: 3, kind: input, shape index: {}]
  %s4 = inlined_call_operand.vmem [shape: f32[1,32], index: 4, kind: input, shape index: {}]
  %s5 = inlined_call_operand.<no memory space> [shape: f32[1,1], index: 5, kind: input, shape index: {}]
  %s6 = inlined_call_operand.vmem [shape: f32[16,1], index: 6, kind: output, shape index: {0}]
  %s7 = inlined_call_operand.vmem [shape: f32[16,256], index: 7, kind: output, shape index: {1}]
  %s8 = inlined_call_operand.vmem [shape: f32[16,256], index: 8, kind: output, shape index: {2}]
  %9 = xla_tuple %s6, %s7, %s8
  %s10 = sld [smem:[#allocation0]]
  $region50: #{model_forward.1} parent=0
    _
  %s12 = ssub.s32 1, %s10
  %s13 = scalar_select 0, %s12, %s10
  %v14 = vstv %s5
  %15 = vst [vmem:[#allocation2] sm:$0x1] %v14
  // Predicated region
  $region2: #{model_forward.1} parent=0 // pred_check
    _
  $region3: #{model_forward.1} parent=0 // pred_check_branch
    %17 = sbr.rel (0) target = $region5
  $region4: #{model_forward.1} parent=0 // pred_region
    _
  $region5: #{model_forward.1} parent=0 // pred_fallthru
    _
  // Predicated region
  $region6: #{model_forward.1} parent=0 // pred_check
    _
  $region7: #{model_forward.1} parent=0 // pred_check_branch
    %19 = sbr.rel (0) target = $region9
  $region8: #{model_forward.1} parent=0 // pred_region
    _
  $region9: #{model_forward.1} parent=0 // pred_fallthru
    _
  // Predicated region
  $region10: #{model_forward.1} parent=0 // pred_check
    _
  $region11: #{model_forward.1} parent=0 // pred_check_branch
    %21 = sbr.rel (0) target = $region13
  $region12: #{model_forward.1} parent=0 // pred_region
    _
  $region13: #{model_forward.1} parent=0 // pred_fallthru
    _
  // Predicated region
  $region14: #{model_forward.1} parent=0 // pred_check
    _
  $region15: #{model_forward.1} parent=0 // pred_check_branch
    %23 = sbr.rel (0) target = $region17
  $region16: #{model_forward.1} parent=0 // pred_region
    _
  $region17: #{model_forward.1} parent=0 // pred_fallthru
    _
  // Predicated region
  $region18: #{model_forward.1} parent=0 // pred_check
    _
  $region19: #{model_forward.1} parent=0 // pred_check_branch
    %25 = sbr.rel (0) target = $region21
  $region20: #{model_forward.1} parent=0 // pred_region
    _
  $region21: #{model_forward.1} parent=0 // pred_fallthru
    _
  // Predicated region
  $region22: #{model_forward.1} parent=0 // pred_check
    _
  $region23: #{model_forward.1} parent=0 // pred_check_branch
    %27 = sbr.rel (0) target = $region25
  $region24: #{model_forward.1} parent=0 // pred_region
    _
  $region25: #{model_forward.1} parent=0 // pred_fallthru
    _
  %v28 = vld [vmem:[%s1] sm:$0xff]
  %v29 = vld [vmem:[%s2] sm:$0xff]
  %v30 = vld [vmem:[%s2 + $0x8] sm:$0xff]
  %v31 = vld [vmem:[%s2 + $0x10] sm:$0xff]
  %v32 = vld [vmem:[%s2 + $0x18] sm:$0xff]
  %v33 = vld [vmem:[%s0] sm:$0xff]
  %v34 = vld [vmem:[%s0 + $0x8] sm:$0xff]
  %v35 = vld [vmem:[%s0 + $0x10] sm:$0xff]
  %v36 = vld [vmem:[%s0 + $0x18] sm:$0xff]
  %v37 = vld [vmem:[%s0 + $0x20] sm:$0xff]
  %v38 = vld [vmem:[%s0 + $0x28] sm:$0xff]
  %v39 = vld [vmem:[%s0 + $0x30] sm:$0xff]
  %v40 = vld [vmem:[%s0 + $0x38] sm:$0xff]
  %v41 = vld [vmem:[%s0 + $0x40] sm:$0xff]
  %v42 = vld [vmem:[%s0 + $0x48] sm:$0xff]
  %v43 = vld [vmem:[%s0 + $0x50] sm:$0xff]
  %v44 = vld [vmem:[%s0 + $0x58] sm:$0xff]
  %v45 = vld [vmem:[%s0 + $0x60] sm:$0xff]
  %v46 = vld [vmem:[%s0 + $0x68] sm:$0xff]
  %v47 = vld [vmem:[%s0 + $0x70] sm:$0xff]
  %v48 = vld [vmem:[%s0 + $0x78] sm:$0xff]
  %v49 = vcombine.low %v33, %v35
  %v50 = vcombine.high %v33, %v35
  %v52 = vunpack.c.l.s4 1983009808
  %v53 = vunpack.c.0.s8 %v52
  %v54 = vlaneseq
  %v55 = vshrl.u32 %v54, 7
  %v56 = vsub.s32 %v53, %v55
  %v57 = vrot.slane %v49, %v56
  %v59 = vunpack.c.l.s4 1983009808
  %v60 = vunpack.c.0.s8 %v59
  %v61 = vlaneseq
  %v62 = vshrl.u32 %v61, 7
  %v63 = vsub.s32 %v60, %v62
  %v64 = vrot.slane %v50, %v63
  %v65 = vcombine.low %v34, %v36
  %v66 = vcombine.high %v34, %v36
  %v68 = vunpack.c.l.s4 1983009808
  %v69 = vunpack.c.0.s8 %v68
  %v70 = vlaneseq
  %v71 = vshrl.u32 %v70, 7
  %v72 = vsub.s32 %v69, %v71
  %v73 = vrot.slane %v65, %v72
  %v75 = vunpack.c.l.s4 1983009808
  %v76 = vunpack.c.0.s8 %v75
  %v77 = vlaneseq
  %v78 = vshrl.u32 %v77, 7
  %v79 = vsub.s32 %v76, %v78
  %v80 = vrot.slane %v66, %v79
  %v81 = vcombine.low %v37, %v39
  %v82 = vcombine.high %v37, %v39
  %v84 = vunpack.c.l.s4 1983009808
  %v85 = vunpack.c.0.s8 %v84
  %v86 = vlaneseq
  %v87 = vshrl.u32 %v86, 7
  %v88 = vsub.s32 %v85, %v87
  %v89 = vrot.slane %v81, %v88
  %v91 = vunpack.c.l.s4 1983009808
  %v92 = vunpack.c.0.s8 %v91
  %v93 = vlaneseq
  %v94 = vshrl.u32 %v93, 7
  %v95 = vsub.s32 %v92, %v94
  %v96 = vrot.slane %v82, %v95
  %v97 = vcombine.low %v38, %v40
  %v98 = vcombine.high %v38, %v40
  %v100 = vunpack.c.l.s4 1983009808
  %v101 = vunpack.c.0.s8 %v100
  %v102 = vlaneseq
  %v103 = vshrl.u32 %v102, 7
  %v104 = vsub.s32 %v101, %v103
  %v105 = vrot.slane %v97, %v104
  %v107 = vunpack.c.l.s4 1983009808
  %v108 = vunpack.c.0.s8 %v107
  %v109 = vlaneseq
  %v110 = vshrl.u32 %v109, 7
  %v111 = vsub.s32 %v108, %v110
  %v112 = vrot.slane %v98, %v111
  %v113 = vcombine.low %v57, %v73
  %v114 = vcombine.high %v57, %v73
  %v116 = vunpack.c.l.s4 1934713408
  %v117 = vunpack.c.0.s8 %v116
  %v118 = vlaneseq
  %v119 = vshrl.u32 %v118, 7
  %v120 = vsub.s32 %v117, %v119
  %v121 = vrot.slane %v113, %v120
  %v123 = vunpack.c.l.s4 1934713408
  %v124 = vunpack.c.0.s8 %v123
  %v125 = vlaneseq
  %v126 = vshrl.u32 %v125, 7
  %v127 = vsub.s32 %v124, %v126
  %v128 = vrot.slane %v114, %v127
  %v129 = vcombine.low %v64, %v80
  %v130 = vcombine.high %v64, %v80
  %v132 = vunpack.c.l.s4 1934713408
  %v133 = vunpack.c.0.s8 %v132
  %v134 = vlaneseq
  %v135 = vshrl.u32 %v134, 7
  %v136 = vsub.s32 %v133, %v135
  %v137 = vrot.slane %v129, %v136
  %v139 = vunpack.c.l.s4 1934713408
  %v140 = vunpack.c.0.s8 %v139
  %v141 = vlaneseq
  %v142 = vshrl.u32 %v141, 7
  %v143 = vsub.s32 %v140, %v142
  %v144 = vrot.slane %v130, %v143
  %v145 = vcombine.low %v89, %v105
  %v146 = vcombine.high %v89, %v105
  %v148 = vunpack.c.l.s4 1934713408
  %v149 = vunpack.c.0.s8 %v148
  %v150 = vlaneseq
  %v151 = vshrl.u32 %v150, 7
  %v152 = vsub.s32 %v149, %v151
  %v153 = vrot.slane %v145, %v152
  %v155 = vunpack.c.l.s4 1934713408
  %v156 = vunpack.c.0.s8 %v155
  %v157 = vlaneseq
  %v158 = vshrl.u32 %v157, 7
  %v159 = vsub.s32 %v156, %v158
  %v160 = vrot.slane %v146, %v159
  %v161 = vcombine.low %v96, %v112
  %v162 = vcombine.high %v96, %v112
  %v164 = vunpack.c.l.s4 1934713408
  %v165 = vunpack.c.0.s8 %v164
  %v166 = vlaneseq
  %v167 = vshrl.u32 %v166, 7
  %v168 = vsub.s32 %v165, %v167
  %v169 = vrot.slane %v161, %v168
  %v171 = vunpack.c.l.s4 1934713408
  %v172 = vunpack.c.0.s8 %v171
  %v173 = vlaneseq
  %v174 = vshrl.u32 %v173, 7
  %v175 = vsub.s32 %v172, %v174
  %v176 = vrot.slane %v162, %v175
  %v177 = vcombine.low %v121, %v153
  %v178 = vcombine.high %v121, %v153
  %v179 = vcombine.low %v128, %v160
  %v180 = vcombine.high %v128, %v160
  %v181 = vcombine.low %v137, %v169
  %v182 = vcombine.high %v137, %v169
  %v183 = vcombine.low %v144, %v176
  %v184 = vcombine.high %v144, %v176
  %v185 = vcombine.low %v41, %v43
  %v186 = vcombine.high %v41, %v43
  %v188 = vunpack.c.l.s4 1983009808
  %v189 = vunpack.c.0.s8 %v188
  %v190 = vlaneseq
  %v191 = vshrl.u32 %v190, 7
  %v192 = vsub.s32 %v189, %v191
  %v193 = vrot.slane %v185, %v192
  %v195 = vunpack.c.l.s4 1983009808
  %v196 = vunpack.c.0.s8 %v195
  %v197 = vlaneseq
  %v198 = vshrl.u32 %v197, 7
  %v199 = vsub.s32 %v196, %v198
  %v200 = vrot.slane %v186, %v199
  %v201 = vcombine.low %v42, %v44
  %v202 = vcombine.high %v42, %v44
  %v204 = vunpack.c.l.s4 1983009808
  %v205 = vunpack.c.0.s8 %v204
  %v206 = vlaneseq
  %v207 = vshrl.u32 %v206, 7
  %v208 = vsub.s32 %v205, %v207
  %v209 = vrot.slane %v201, %v208
  %v211 = vunpack.c.l.s4 1983009808
  %v212 = vunpack.c.0.s8 %v211
  %v213 = vlaneseq
  %v214 = vshrl.u32 %v213, 7
  %v215 = vsub.s32 %v212, %v214
  %v216 = vrot.slane %v202, %v215
  %v217 = vcombine.low %v45, %v47
  %v218 = vcombine.high %v45, %v47
  %v220 = vunpack.c.l.s4 1983009808
  %v221 = vunpack.c.0.s8 %v220
  %v222 = vlaneseq
  %v223 = vshrl.u32 %v222, 7
  %v224 = vsub.s32 %v221, %v223
  %v225 = vrot.slane %v217, %v224
  %v227 = vunpack.c.l.s4 1983009808
  %v228 = vunpack.c.0.s8 %v227
  %v229 = vlaneseq
  %v230 = vshrl.u32 %v229, 7
  %v231 = vsub.s32 %v228, %v230
  %v232 = vrot.slane %v218, %v231
  %v233 = vcombine.low %v46, %v48
  %v234 = vcombine.high %v46, %v48
  %v236 = vunpack.c.l.s4 1983009808
  %v237 = vunpack.c.0.s8 %v236
  %v238 = vlaneseq
  %v239 = vshrl.u32 %v238, 7
  %v240 = vsub.s32 %v237, %v239
  %v241 = vrot.slane %v233, %v240
  %v243 = vunpack.c.l.s4 1983009808
  %v244 = vunpack.c.0.s8 %v243
  %v245 = vlaneseq
  %v246 = vshrl.u32 %v245, 7
  %v247 = vsub.s32 %v244, %v246
  %v248 = vrot.slane %v234, %v247
  %v249 = vcombine.low %v193, %v209
  %v250 = vcombine.high %v193, %v209
  %v252 = vunpack.c.l.s4 1934713408
  %v253 = vunpack.c.0.s8 %v252
  %v254 = vlaneseq
  %v255 = vshrl.u32 %v254, 7
  %v256 = vsub.s32 %v253, %v255
  %v257 = vrot.slane %v249, %v256
  %v259 = vunpack.c.l.s4 1934713408
  %v260 = vunpack.c.0.s8 %v259
  %v261 = vlaneseq
  %v262 = vshrl.u32 %v261, 7
  %v263 = vsub.s32 %v260, %v262
  %v264 = vrot.slane %v250, %v263
  %v265 = vcombine.low %v200, %v216
  %v266 = vcombine.high %v200, %v216
  %v268 = vunpack.c.l.s4 1934713408
  %v269 = vunpack.c.0.s8 %v268
  %v270 = vlaneseq
  %v271 = vshrl.u32 %v270, 7
  %v272 = vsub.s32 %v269, %v271
  %v273 = vrot.slane %v265, %v272
  %v275 = vunpack.c.l.s4 1934713408
  %v276 = vunpack.c.0.s8 %v275
  %v277 = vlaneseq
  %v278 = vshrl.u32 %v277, 7
  %v279 = vsub.s32 %v276, %v278
  %v280 = vrot.slane %v266, %v279
  %v281 = vcombine.low %v225, %v241
  %v282 = vcombine.high %v225, %v241
  %v284 = vunpack.c.l.s4 1934713408
  %v285 = vunpack.c.0.s8 %v284
  %v286 = vlaneseq
  %v287 = vshrl.u32 %v286, 7
  %v288 = vsub.s32 %v285, %v287
  %v289 = vrot.slane %v281, %v288
  %v291 = vunpack.c.l.s4 1934713408
  %v292 = vunpack.c.0.s8 %v291
  %v293 = vlaneseq
  %v294 = vshrl.u32 %v293, 7
  %v295 = vsub.s32 %v292, %v294
  %v296 = vrot.slane %v282, %v295
  %v297 = vcombine.low %v232, %v248
  %v298 = vcombine.high %v232, %v248
  %v300 = vunpack.c.l.s4 1934713408
  %v301 = vunpack.c.0.s8 %v300
  %v302 = vlaneseq
  %v303 = vshrl.u32 %v302, 7
  %v304 = vsub.s32 %v301, %v303
  %v305 = vrot.slane %v297, %v304
  %v307 = vunpack.c.l.s4 1934713408
  %v308 = vunpack.c.0.s8 %v307
  %v309 = vlaneseq
  %v310 = vshrl.u32 %v309, 7
  %v311 = vsub.s32 %v308, %v310
  %v312 = vrot.slane %v298, %v311
  %v313 = vcombine.low %v257, %v289
  %v314 = vcombine.high %v257, %v289
  %v315 = vcombine.low %v264, %v296
  %v316 = vcombine.high %v264, %v296
  %v317 = vcombine.low %v273, %v305
  %v318 = vcombine.high %v273, %v305
  %v319 = vcombine.low %v280, %v312
  %v320 = vcombine.high %v280, %v312
  %v321 = vld [vmem:[%s3] sm:$0x1]
  %v323 = vlaneseq
  %v324 = vshrl.u32 %v323, 7
  %v325 = vsub.s32 0, %v324
  %v326 = vrot.slane %v321, %v325
  %vm328 = vcmask 64512
  %v330 = vsel %vm328, %v177, 0
  %v333 = vsel %vm328, %v313, 0
  %v336 = vsel %vm328, %v178, 0
  %v339 = vsel %vm328, %v314, 0
  %v342 = vsel %vm328, %v179, 0
  %v345 = vsel %vm328, %v315, 0
  %v348 = vsel %vm328, %v180, 0
  %v351 = vsel %vm328, %v316, 0
  %v354 = vsel %vm328, %v181, 0
  %v357 = vsel %vm328, %v317, 0
  %v360 = vsel %vm328, %v182, 0
  %v363 = vsel %vm328, %v318, 0
  %v366 = vsel %vm328, %v183, 0
  %v369 = vsel %vm328, %v319, 0
  %v372 = vsel %vm328, %v184, 0
  %v375 = vsel %vm328, %v320, 0
  %377 = vmatprep.subr.mxu0 0.0
  %378 = vmatpush1.msra.mxu0 %v28
  %379 = vmatprep.subr.mxu0 0.0
  %380 = vmatpush1.msra.mxu0 0.0
  %381 = vmatprep.subr.mxu0 0.0
  %382 = vmatpush1.msra.mxu0 0.0
  %383 = vmatprep.subr.mxu0 0.0
  %384 = vmatpush1.msra.mxu0 0.0
  %385 = vmatprep.subr.mxu0 0.0
  %386 = vmatpush1.msra.mxu0 0.0
  %387 = vmatprep.subr.mxu0 0.0
  %388 = vmatpush1.msra.mxu0 0.0
  %389 = vmatprep.subr.mxu0 0.0
  %390 = vmatpush1.msra.mxu0 0.0
  %391 = vmatprep.subr.mxu0 0.0
  %392 = vmatpush1.msra.mxu0 0.0
  %393 = vmatprep.subr.mxu0 0.0
  %394 = vmatpush1.msra.mxu0 0.0
  %395 = vmatprep.subr.mxu0 0.0
  %396 = vmatpush1.msra.mxu0 0.0
  %397 = vmatprep.subr.mxu0 0.0
  %398 = vmatpush1.msra.mxu0 0.0
  %399 = vmatprep.subr.mxu0 0.0
  %400 = vmatpush1.msra.mxu0 0.0
  %401 = vmatprep.subr.mxu0 0.0
  %402 = vmatpush1.msra.mxu0 0.0
  %403 = vmatprep.subr.mxu0 0.0
  %404 = vmatpush1.msra.mxu0 0.0
  %405 = vmatprep.subr.mxu0 0.0
  %406 = vmatpush1.msra.mxu0 0.0
  %407 = vmatprep.subr.mxu0 0.0
  %408 = vmatpush1.msra.mxu0 0.0
  %409 = vmatprep.subr.mxu0 0.0
  %410 = vmatpush1.msra.mxu0 0.0
  %411 = vmatprep.subr.mxu0 0.0
  %412 = vmatpush1.msra.mxu0 0.0
  %413 = vmatprep.subr.mxu0 0.0
  %414 = vmatpush1.msra.mxu0 0.0
  %415 = vmatprep.subr.mxu0 0.0
  %416 = vmatpush1.msra.mxu0 0.0
  %417 = vmatprep.subr.mxu0 0.0
  %418 = vmatpush1.msra.mxu0 0.0
  %419 = vmatprep.subr.mxu0 0.0
  %420 = vmatpush1.msra.mxu0 0.0
  %421 = vmatprep.subr.mxu0 0.0
  %422 = vmatpush1.msra.mxu0 0.0
  %423 = vmatprep.subr.mxu0 0.0
  %424 = vmatpush1.msra.mxu0 0.0
  %425 = vmatprep.subr.mxu0 0.0
  %426 = vmatpush1.msra.mxu0 0.0
  %427 = vmatprep.subr.mxu0 0.0
  %428 = vmatpush1.msra.mxu0 0.0
  %429 = vmatprep.subr.mxu0 0.0
  %430 = vmatpush1.msra.mxu0 0.0
  %431 = vmatprep.subr.mxu0 0.0
  %432 = vmatpush1.msra.mxu0 0.0
  %433 = vmatprep.subr.mxu0 0.0
  %434 = vmatpush1.msra.mxu0 0.0
  %435 = vmatprep.subr.mxu0 0.0
  %436 = vmatpush1.msra.mxu0 0.0
  %437 = vmatprep.subr.mxu0 0.0
  %438 = vmatpush1.msra.mxu0 0.0
  %439 = vmatprep.subr.mxu0 0.0
  %440 = vmatpush1.msra.mxu0 0.0
  %441 = vmatprep.mubr.f32.mxu0 0.0
  %442 = vmatmul.mubr.f32.gmra.mrb[0].mxu0 %v330
  %v443 = vpop.f32.mrb[0].mxu0
  %v444 = vadd.f32 %v326, %v443
  %v445 = vpop.f32.mrb[0].mxu0
  %446 = vmatprep.mubr.f32.mxu0 0.0
  %447 = vmatmul.mubr.f32.gmra.mrb[0].mxu0 %v333
  %v448 = vpop.f32.mrb[0].mxu0
  %v449 = vadd.f32 %v326, %v448
  %v450 = vpop.f32.mrb[0].mxu0
  %451 = vmatprep.mubr.f32.mxu0 0.0
  %452 = vmatmul.mubr.f32.gmra.mrb[0].mxu0 %v336
  %v453 = vpop.f32.mrb[0].mxu0
  %v454 = vadd.f32 %v326, %v453
  %v455 = vpop.f32.mrb[0].mxu0
  %456 = vmatprep.mubr.f32.mxu0 0.0
  %457 = vmatmul.mubr.f32.gmra.mrb[0].mxu0 %v339
  %v458 = vpop.f32.mrb[0].mxu0
  %v459 = vadd.f32 %v326, %v458
  %v460 = vpop.f32.mrb[0].mxu0
  %461 = vmatprep.mubr.f32.mxu0 0.0
  %462 = vmatmul.mubr.f32.gmra.mrb[0].mxu0 %v342
  %v463 = vpop.f32.mrb[0].mxu0
  %v464 = vadd.f32 %v326, %v463
  %v465 = vpop.f32.mrb[0].mxu0
  %466 = vmatprep.mubr.f32.mxu0 0.0
  %467 = vmatmul.mubr.f32.gmra.mrb[0].mxu0 %v345
  %v468 = vpop.f32.mrb[0].mxu0
  %v469 = vadd.f32 %v326, %v468
  %v470 = vpop.f32.mrb[0].mxu0
  %471 = vmatprep.mubr.f32.mxu0 0.0
  %472 = vmatmul.mubr.f32.gmra.mrb[0].mxu0 %v348
  %v473 = vpop.f32.mrb[0].mxu0
  %v474 = vadd.f32 %v326, %v473
  %v475 = vpop.f32.mrb[0].mxu0
  %476 = vmatprep.mubr.f32.mxu0 0.0
  %477 = vmatmul.mubr.f32.gmra.mrb[0].mxu0 %v351
  %v478 = vpop.f32.mrb[0].mxu0
  %v479 = vadd.f32 %v326, %v478
  %v480 = vpop.f32.mrb[0].mxu0
  %481 = vmatprep.mubr.f32.mxu0 0.0
  %482 = vmatmul.mubr.f32.gmra.mrb[0].mxu0 %v354
  %v483 = vpop.f32.mrb[0].mxu0
  %v484 = vadd.f32 %v326, %v483
  %v485 = vpop.f32.mrb[0].mxu0
  %486 = vmatprep.mubr.f32.mxu0 0.0
  %487 = vmatmul.mubr.f32.gmra.mrb[0].mxu0 %v357
  %v488 = vpop.f32.mrb[0].mxu0
  %v489 = vadd.f32 %v326, %v488
  %v490 = vpop.f32.mrb[0].mxu0
  %491 = vmatprep.mubr.f32.mxu0 0.0
  %492 = vmatmul.mubr.f32.gmra.mrb[0].mxu0 %v360
  %v493 = vpop.f32.mrb[0].mxu0
  %v494 = vadd.f32 %v326, %v493
  %v495 = vpop.f32.mrb[0].mxu0
  %496 = vmatprep.mubr.f32.mxu0 0.0
  %497 = vmatmul.mubr.f32.gmra.mrb[0].mxu0 %v363
  %v498 = vpop.f32.mrb[0].mxu0
  %v499 = vadd.f32 %v326, %v498
  %v500 = vpop.f32.mrb[0].mxu0
  %501 = vmatprep.mubr.f32.mxu0 0.0
  %502 = vmatmul.mubr.f32.gmra.mrb[0].mxu0 %v366
  %v503 = vpop.f32.mrb[0].mxu0
  %v504 = vadd.f32 %v326, %v503
  %v505 = vpop.f32.mrb[0].mxu0
  %506 = vmatprep.mubr.f32.mxu0 0.0
  %507 = vmatmul.mubr.f32.gmra.mrb[0].mxu0 %v369
  %v508 = vpop.f32.mrb[0].mxu0
  %v509 = vadd.f32 %v326, %v508
  %v510 = vpop.f32.mrb[0].mxu0
  %511 = vmatprep.mubr.f32.mxu0 0.0
  %512 = vmatmul.mubr.f32.gmra.mrb[0].mxu0 %v372
  %v513 = vpop.f32.mrb[0].mxu0
  %v514 = vadd.f32 %v326, %v513
  %v515 = vpop.f32.mrb[0].mxu0
  %516 = vmatprep.mubr.f32.mxu0 0.0
  %517 = vmatmul.mubr.f32.gmra.mrb[0].mxu0 %v375
  %v518 = vpop.f32.mrb[0].mxu0
  %v519 = vadd.f32 %v326, %v518
  %v520 = vpop.f32.mrb[0].mxu0
  %521 = vdwg.mxu0
  %vm522 = vcmask 261120
  %v524 = vsel %vm522, 0.0, 0
  %526 = vmatprep.subr.mxu0 0.0
  %527 = vmatpush1.msra.mxu0 %v29
  %528 = vmatprep.subr.mxu0 0.0
  %529 = vmatpush1.msra.mxu0 %v30
  %530 = vmatprep.subr.mxu0 0.0
  %531 = vmatpush1.msra.mxu0 %v31
  %532 = vmatprep.subr.mxu0 0.0
  %533 = vmatpush1.msra.mxu0 %v32
  %534 = vmatprep.subr.mxu0 0.0
  %535 = vmatpush1.msra.mxu0 0.0
  %536 = vmatprep.subr.mxu0 0.0
  %537 = vmatpush1.msra.mxu0 0.0
  %538 = vmatprep.subr.mxu0 0.0
  %539 = vmatpush1.msra.mxu0 0.0
  %540 = vmatprep.subr.mxu0 0.0
  %541 = vmatpush1.msra.mxu0 0.0
  %542 = vmatprep.subr.mxu0 0.0
  %543 = vmatpush1.msra.mxu0 0.0
  %544 = vmatprep.subr.mxu0 0.0
  %545 = vmatpush1.msra.mxu0 0.0
  %546 = vmatprep.subr.mxu0 0.0
  %547 = vmatpush1.msra.mxu0 0.0
  %548 = vmatprep.subr.mxu0 0.0
  %549 = vmatpush1.msra.mxu0 0.0
  %550 = vmatprep.subr.mxu0 0.0
  %551 = vmatpush1.msra.mxu0 0.0
  %552 = vmatprep.subr.mxu0 0.0
  %553 = vmatpush1.msra.mxu0 0.0
  %554 = vmatprep.subr.mxu0 0.0
  %555 = vmatpush1.msra.mxu0 0.0
  %556 = vmatprep.subr.mxu0 0.0
  %557 = vmatpush1.msra.mxu0 0.0
  %558 = vmatprep.subr.mxu0 0.0
  %559 = vmatpush1.msra.mxu0 0.0
  %560 = vmatprep.subr.mxu0 0.0
  %561 = vmatpush1.msra.mxu0 0.0
  %562 = vmatprep.subr.mxu0 0.0
  %563 = vmatpush1.msra.mxu0 0.0
  %564 = vmatprep.subr.mxu0 0.0
  %565 = vmatpush1.msra.mxu0 0.0
  %566 = vmatprep.subr.mxu0 0.0
  %567 = vmatpush1.msra.mxu0 0.0
  %568 = vmatprep.subr.mxu0 0.0
  %569 = vmatpush1.msra.mxu0 0.0
  %570 = vmatprep.subr.mxu0 0.0
  %571 = vmatpush1.msra.mxu0 0.0
  %572 = vmatprep.subr.mxu0 0.0
  %573 = vmatpush1.msra.mxu0 0.0
  %574 = vmatprep.subr.mxu0 0.0
  %575 = vmatpush1.msra.mxu0 0.0
  %576 = vmatprep.subr.mxu0 0.0
  %577 = vmatpush1.msra.mxu0 0.0
  %578 = vmatprep.subr.mxu0 0.0
  %579 = vmatpush1.msra.mxu0 0.0
  %580 = vmatprep.subr.mxu0 0.0
  %581 = vmatpush1.msra.mxu0 0.0
  %582 = vmatprep.subr.mxu0 0.0
  %583 = vmatpush1.msra.mxu0 0.0
  %584 = vmatprep.subr.mxu0 0.0
  %585 = vmatpush1.msra.mxu0 0.0
  %586 = vmatprep.subr.mxu0 0.0
  %587 = vmatpush1.msra.mxu0 0.0
  %588 = vmatprep.subr.mxu0 0.0
  %589 = vmatpush1.msra.mxu0 0.0
  %590 = vmatprep.mubr.f32.mxu0 0.0
  %591 = vmatmul.mubr.f32.gmra.mrb[0].mxu0 %v524
  %v592 = vpop.f32.mrb[0].mxu0
  %v593 = vadd.f32 0.0, %v592
  %v594 = vpop.f32.mrb[0].mxu0
  %595 = vmatprep.mubr.f32.mxu0 0.0
  %596 = vmatmul.mubr.f32.gmra.mrb[0].mxu0 %v524
  %v597 = vpop.f32.mrb[0].mxu0
  %v598 = vadd.f32 0.0, %v597
  %v599 = vpop.f32.mrb[0].mxu0
  %600 = vdwg.mxu0
  %v601 = vadd.f32 %v444, %v593
  %v602 = vadd.f32 %v449, %v598
  %v603 = vxor.u32 %v601, 2147483648
  %v604 = vxor.u32 %v602, 2147483648
  %v605 = vmul.f32 %v603, 1.442695
  %v606 = vpow.pop %v605
  %v607 = vmul.f32 %v604, 1.442695
  %v608 = vpow.pop %v607
  %v609 = vadd.f32 %v606, 1.0
  %v610 = vadd.f32 %v608, 1.0
  %v611 = vrcp.pop %v609
  %v612 = vmul.f32 1.0, %v611
  %v613 = vrcp.pop %v610
  %v614 = vmul.f32 1.0, %v613
  %v615 = vtanh.pop %v601
  %v616 = vtanh.pop %v602
  %v617 = vmul.f32 %v612, 0.0
  %v618 = vmul.f32 %v614, 0.0
  %621 = vrot.lane.b32.xlu0 %v615, 64
  %v622 = vpop.permute.xlu0 %621
  %623 = vrot.lane.b32.xlu0 %v616, 64
  %v624 = vpop.permute.xlu0 %623
  %v627 = vmul.f32 %v612, %v622
  %v628 = vmul.f32 %v614, %v624
  %631 = vrot.lane.b32.xlu0 %v627, 96
  %v632 = vpop.permute.xlu0 %631
  %633 = vrot.lane.b32.xlu0 %v628, 96
  %v634 = vpop.permute.xlu0 %633
  %v637 = vadd.f32 %v617, %v632
  %v638 = vadd.f32 %v618, %v634
  %v639 = vtanh.pop %v637
  %v640 = vtanh.pop %v638
  %643 = vrot.lane.b32.xlu0 %v639, 64
  %v644 = vpop.permute.xlu0 %643
  %645 = vrot.lane.b32.xlu0 %v640, 64
  %v646 = vpop.permute.xlu0 %645
  %v649 = vmul.f32 %v612, %v644
  %v650 = vmul.f32 %v614, %v646
  %653 = vrot.lane.b32.xlu0 %v649, 64
  %v654 = vpop.permute.xlu0 %653
  %655 = vrot.lane.b32.xlu0 %v650, 64
  %v656 = vpop.permute.xlu0 %655
  %659 = vst.msk [vmem:[%s7] sm:$0xff] %vm522, %v654
  %660 = vst.msk [vmem:[%s7 + $0x10] sm:$0xff] %vm522, %v656
  %661 = vst.msk [vmem:[%s8] sm:$0xff] %vm522, %v637
  %662 = vst.msk [vmem:[%s8 + $0x10] sm:$0xff] %vm522, %v638
  %v663 = vsel %vm522, %v654, 0
  %v665 = vsel %vm522, %v656, 0
  %667 = vmatprep.subr.mxu0 0.0
  %668 = vmatpush1.msra.mxu0 %v29
  %669 = vmatprep.subr.mxu0 0.0
  %670 = vmatpush1.msra.mxu0 %v30
  %671 = vmatprep.subr.mxu0 0.0
  %672 = vmatpush1.msra.mxu0 %v31
  %673 = vmatprep.subr.mxu0 0.0
  %674 = vmatpush1.msra.mxu0 %v32
  %675 = vmatprep.subr.mxu0 0.0
  %676 = vmatpush1.msra.mxu0 0.0
  %677 = vmatprep.subr.mxu0 0.0
  %678 = vmatpush1.msra.mxu0 0.0
  %679 = vmatprep.subr.mxu0 0.0
  %680 = vmatpush1.msra.mxu0 0.0
  %681 = vmatprep.subr.mxu0 0.0
  %682 = vmatpush1.msra.mxu0 0.0
  %683 = vmatprep.subr.mxu0 0.0
  %684 = vmatpush1.msra.mxu0 0.0
  %685 = vmatprep.subr.mxu0 0.0
  %686 = vmatpush1.msra.mxu0 0.0
  %687 = vmatprep.subr.mxu0 0.0
  %688 = vmatpush1.msra.mxu0 0.0
  %689 = vmatprep.subr.mxu0 0.0
  %690 = vmatpush1.msra.mxu0 0.0
  %691 = vmatprep.subr.mxu0 0.0
  %692 = vmatpush1.msra.mxu0 0.0
  %693 = vmatprep.subr.mxu0 0.0
  %694 = vmatpush1.msra.mxu0 0.0
  %695 = vmatprep.subr.mxu0 0.0
  %696 = vmatpush1.msra.mxu0 0.0
  %697 = vmatprep.subr.mxu0 0.0
  %698 = vmatpush1.msra.mxu0 0.0
  %699 = vmatprep.subr.mxu0 0.0
  %700 = vmatpush1.msra.mxu0 0.0
  %701 = vmatprep.subr.mxu0 0.0
  %702 = vmatpush1.msra.mxu0 0.0
  %703 = vmatprep.subr.mxu0 0.0
  %704 = vmatpush1.msra.mxu0 0.0
  %705 = vmatprep.subr.mxu0 0.0
  %706 = vmatpush1.msra.mxu0 0.0
  %707 = vmatprep.subr.mxu0 0.0
  %708 = vmatpush1.msra.mxu0 0.0
  %709 = vmatprep.subr.mxu0 0.0
  %710 = vmatpush1.msra.mxu0 0.0
  %711 = vmatprep.subr.mxu0 0.0
  %712 = vmatpush1.msra.mxu0 0.0
  %713 = vmatprep.subr.mxu0 0.0
  %714 = vmatpush1.msra.mxu0 0.0
  %715 = vmatprep.subr.mxu0 0.0
  %716 = vmatpush1.msra.mxu0 0.0
  %717 = vmatprep.subr.mxu0 0.0
  %718 = vmatpush1.msra.mxu0 0.0
  %719 = vmatprep.subr.mxu0 0.0
  %720 = vmatpush1.msra.mxu0 0.0
  %721 = vmatprep.subr.mxu0 0.0
  %722 = vmatpush1.msra.mxu0 0.0
  %723 = vmatprep.subr.mxu0 0.0
  %724 = vmatpush1.msra.mxu0 0.0
  %725 = vmatprep.subr.mxu0 0.0
  %726 = vmatpush1.msra.mxu0 0.0
  %727 = vmatprep.subr.mxu0 0.0
  %728 = vmatpush1.msra.mxu0 0.0
  %729 = vmatprep.subr.mxu0 0.0
  %730 = vmatpush1.msra.mxu0 0.0
  %731 = vmatprep.mubr.f32.mxu0 0.0
  %732 = vmatmul.mubr.f32.gmra.mrb[0].mxu0 %v663
  %v733 = vpop.f32.mrb[0].mxu0
  %v734 = vadd.f32 0.0, %v733
  %v735 = vpop.f32.mrb[0].mxu0
  %736 = vmatprep.mubr.f32.mxu0 0.0
  %737 = vmatmul.mubr.f32.gmra.mrb[0].mxu0 %v665
  %v738 = vpop.f32.mrb[0].mxu0
  %v739 = vadd.f32 0.0, %v738
  %v740 = vpop.f32.mrb[0].mxu0
  %741 = vdwg.mxu0
  %v742 = vadd.f32 %v454, %v734
  %v743 = vadd.f32 %v459, %v739
  %v744 = vxor.u32 %v742, 2147483648
  %v745 = vxor.u32 %v743, 2147483648
  %v746 = vmul.f32 %v744, 1.442695
  %v747 = vpow.pop %v746
  %v748 = vmul.f32 %v745, 1.442695
  %v749 = vpow.pop %v748
  %v750 = vadd.f32 %v747, 1.0
  %v751 = vadd.f32 %v749, 1.0
  %v752 = vrcp.pop %v750
  %v753 = vmul.f32 1.0, %v752
  %v754 = vrcp.pop %v751
  %v755 = vmul.f32 1.0, %v754
  %v756 = vtanh.pop %v742
  %v757 = vtanh.pop %v743
  %v758 = vmul.f32 %v753, %v637
  %v759 = vmul.f32 %v755, %v638
  %762 = vrot.lane.b32.xlu0 %v756, 64
  %v763 = vpop.permute.xlu0 %762
  %764 = vrot.lane.b32.xlu0 %v757, 64
  %v765 = vpop.permute.xlu0 %764
  %v768 = vmul.f32 %v753, %v763
  %v769 = vmul.f32 %v755, %v765
  %772 = vrot.lane.b32.xlu0 %v768, 96
  %v773 = vpop.permute.xlu0 %772
  %774 = vrot.lane.b32.xlu0 %v769, 96
  %v775 = vpop.permute.xlu0 %774
  %v778 = vadd.f32 %v758, %v773
  %v779 = vadd.f32 %v759, %v775
  %v780 = vtanh.pop %v778
  %v781 = vtanh.pop %v779
  %784 = vrot.lane.b32.xlu0 %v780, 64
  %v785 = vpop.permute.xlu0 %784
  %786 = vrot.lane.b32.xlu0 %v781, 64
  %v787 = vpop.permute.xlu0 %786
  %v790 = vmul.f32 %v753, %v785
  %v791 = vmul.f32 %v755, %v787
  %794 = vrot.lane.b32.xlu0 %v790, 96
  %v795 = vpop.permute.xlu0 %794
  %796 = vrot.lane.b32.xlu0 %v791, 96
  %v797 = vpop.permute.xlu0 %796
  %vm800 = vcmask 523520
  %801 = vst.msk [vmem:[%s7] sm:$0xff] %vm800, %v795
  %802 = vst.msk [vmem:[%s7 + $0x10] sm:$0xff] %vm800, %v797
  %805 = vrot.lane.b32.xlu0 %v778, 32
  %v806 = vpop.permute.xlu0 %805
  %807 = vrot.lane.b32.xlu0 %v779, 32
  %v808 = vpop.permute.xlu0 %807
  %811 = vst.msk [vmem:[%s8] sm:$0xff] %vm800, %v806
  %812 = vst.msk [vmem:[%s8 + $0x10] sm:$0xff] %vm800, %v808
  %813 = vrot.lane.b32.xlu0 %v790, 64
  %v814 = vpop.permute.xlu0 %813
  %815 = vrot.lane.b32.xlu0 %v791, 64
  %v816 = vpop.permute.xlu0 %815
  %v817 = vsel %vm522, %v814, 0
  %v819 = vsel %vm522, %v816, 0
  %821 = vmatprep.subr.mxu0 0.0
  %822 = vmatpush1.msra.mxu0 %v29
  %823 = vmatprep.subr.mxu0 0.0
  %824 = vmatpush1.msra.mxu0 %v30
  %825 = vmatprep.subr.mxu0 0.0
  %826 = vmatpush1.msra.mxu0 %v31
  %827 = vmatprep.subr.mxu0 0.0
  %828 = vmatpush1.msra.mxu0 %v32
  %829 = vmatprep.subr.mxu0 0.0
  %830 = vmatpush1.msra.mxu0 0.0
  %831 = vmatprep.subr.mxu0 0.0
  %832 = vmatpush1.msra.mxu0 0.0
  %833 = vmatprep.subr.mxu0 0.0
  %834 = vmatpush1.msra.mxu0 0.0
  %835 = vmatprep.subr.mxu0 0.0
  %836 = vmatpush1.msra.mxu0 0.0
  %837 = vmatprep.subr.mxu0 0.0
  %838 = vmatpush1.msra.mxu0 0.0
  %839 = vmatprep.subr.mxu0 0.0
  %840 = vmatpush1.msra.mxu0 0.0
  %841 = vmatprep.subr.mxu0 0.0
  %842 = vmatpush1.msra.mxu0 0.0
  %843 = vmatprep.subr.mxu0 0.0
  %844 = vmatpush1.msra.mxu0 0.0
  %845 = vmatprep.subr.mxu0 0.0
  %846 = vmatpush1.msra.mxu0 0.0
  %847 = vmatprep.subr.mxu0 0.0
  %848 = vmatpush1.msra.mxu0 0.0
  %849 = vmatprep.subr.mxu0 0.0
  %850 = vmatpush1.msra.mxu0 0.0
  %851 = vmatprep.subr.mxu0 0.0
  %852 = vmatpush1.msra.mxu0 0.0
  %853 = vmatprep.subr.mxu0 0.0
  %854 = vmatpush1.msra.mxu0 0.0
  %855 = vmatprep.subr.mxu0 0.0
  %856 = vmatpush1.msra.mxu0 0.0
  %857 = vmatprep.subr.mxu0 0.0
  %858 = vmatpush1.msra.mxu0 0.0
  %859 = vmatprep.subr.mxu0 0.0
  %860 = vmatpush1.msra.mxu0 0.0
  %861 = vmatprep.subr.mxu0 0.0
  %862 = vmatpush1.msra.mxu0 0.0
  %863 = vmatprep.subr.mxu0 0.0
  %864 = vmatpush1.msra.mxu0 0.0
  %865 = vmatprep.subr.mxu0 0.0
  %866 = vmatpush1.msra.mxu0 0.0
  %867 = vmatprep.subr.mxu0 0.0
  %868 = vmatpush1.msra.mxu0 0.0
  %869 = vmatprep.subr.mxu0 0.0
  %870 = vmatpush1.msra.mxu0 0.0
  %871 = vmatprep.subr.mxu0 0.0
  %872 = vmatpush1.msra.mxu0 0.0
  %873 = vmatprep.subr.mxu0 0.0
  %874 = vmatpush1.msra.mxu0 0.0
  %875 = vmatprep.subr.mxu0 0.0
  %876 = vmatpush1.msra.mxu0 0.0
  %877 = vmatprep.subr.mxu0 0.0
  %878 = vmatpush1.msra.mxu0 0.0
  %879 = vmatprep.subr.mxu0 0.0
  %880 = vmatpush1.msra.mxu0 0.0
  %881 = vmatprep.subr.mxu0 0.0
  %882 = vmatpush1.msra.mxu0 0.0
  %883 = vmatprep.subr.mxu0 0.0
  %884 = vmatpush1.msra.mxu0 0.0
  %885 = vmatprep.mubr.f32.mxu0 0.0
  %886 = vmatmul.mubr.f32.gmra.mrb[0].mxu0 %v817
  %v887 = vpop.f32.mrb[0].mxu0
  %v888 = vadd.f32 0.0, %v887
  %v889 = vpop.f32.mrb[0].mxu0
  %890 = vmatprep.mubr.f32.mxu0 0.0
  %891 = vmatmul.mubr.f32.gmra.mrb[0].mxu0 %v819
  %v892 = vpop.f32.mrb[0].mxu0
  %v893 = vadd.f32 0.0, %v892
  %v894 = vpop.f32.mrb[0].mxu0
  %895 = vdwg.mxu0
  %v896 = vadd.f32 %v464, %v888
  %v897 = vadd.f32 %v469, %v893
  %v898 = vxor.u32 %v896, 2147483648
  %v899 = vxor.u32 %v897, 2147483648
  %v900 = vmul.f32 %v898, 1.442695
  %v901 = vpow.pop %v900
  %v902 = vmul.f32 %v899, 1.442695
  %v903 = vpow.pop %v902
  %v904 = vadd.f32 %v901, 1.0
  %v905 = vadd.f32 %v903, 1.0
  %v906 = vrcp.pop %v904
  %v907 = vmul.f32 1.0, %v906
  %v908 = vrcp.pop %v905
  %v909 = vmul.f32 1.0, %v908
  %v910 = vtanh.pop %v896
  %v911 = vtanh.pop %v897
  %v912 = vmul.f32 %v907, %v778
  %v913 = vmul.f32 %v909, %v779
  %916 = vrot.lane.b32.xlu0 %v910, 64
  %v917 = vpop.permute.xlu0 %916
  %918 = vrot.lane.b32.xlu0 %v911, 64
  %v919 = vpop.permute.xlu0 %918
  %v922 = vmul.f32 %v907, %v917
  %v923 = vmul.f32 %v909, %v919
  %926 = vrot.lane.b32.xlu0 %v922, 96
  %v927 = vpop.permute.xlu0 %926
  %928 = vrot.lane.b32.xlu0 %v923, 96
  %v929 = vpop.permute.xlu0 %928
  %v932 = vadd.f32 %v912, %v927
  %v933 = vadd.f32 %v913, %v929
  %v934 = vtanh.pop %v932
  %v935 = vtanh.pop %v933
  %938 = vrot.lane.b32.xlu0 %v934, 64
  %v939 = vpop.permute.xlu0 %938
  %940 = vrot.lane.b32.xlu0 %v935, 64
  %v941 = vpop.permute.xlu0 %940
  %v944 = vmul.f32 %v907, %v939
  %v945 = vmul.f32 %v909, %v941
  %vm946 = vcmask 785920
  %947 = vst.msk [vmem:[%s7] sm:$0xff] %vm946, %v944
  %948 = vst.msk [vmem:[%s7 + $0x10] sm:$0xff] %vm946, %v945
  %951 = vrot.lane.b32.xlu0 %v932, 64
  %v952 = vpop.permute.xlu0 %951
  %953 = vrot.lane.b32.xlu0 %v933, 64
  %v954 = vpop.permute.xlu0 %953
  %957 = vst.msk [vmem:[%s8] sm:$0xff] %vm946, %v952
  %958 = vst.msk [vmem:[%s8 + $0x10] sm:$0xff] %vm946, %v954
  %961 = vrot.lane.b32.xlu0 %v944, 64
  %v962 = vpop.permute.xlu0 %961
  %963 = vrot.lane.b32.xlu0 %v945, 64
  %v964 = vpop.permute.xlu0 %963
  %v965 = vsel %vm522, %v962, 0
  %v967 = vsel %vm522, %v964, 0
  %969 = vmatprep.subr.mxu0 0.0
  %970 = vmatpush1.msra.mxu0 %v29
  %971 = vmatprep.subr.mxu0 0.0
  %972 = vmatpush1.msra.mxu0 %v30
  %973 = vmatprep.subr.mxu0 0.0
  %974 = vmatpush1.msra.mxu0 %v31
  %975 = vmatprep.subr.mxu0 0.0
  %976 = vmatpush1.msra.mxu0 %v32
  %977 = vmatprep.subr.mxu0 0.0
  %978 = vmatpush1.msra.mxu0 0.0
  %979 = vmatprep.subr.mxu0 0.0
  %980 = vmatpush1.msra.mxu0 0.0
  %981 = vmatprep.subr.mxu0 0.0
  %982 = vmatpush1.msra.mxu0 0.0
  %983 = vmatprep.subr.mxu0 0.0
  %984 = vmatpush1.msra.mxu0 0.0
  %985 = vmatprep.subr.mxu0 0.0
  %986 = vmatpush1.msra.mxu0 0.0
  %987 = vmatprep.subr.mxu0 0.0
  %988 = vmatpush1.msra.mxu0 0.0
  %989 = vmatprep.subr.mxu0 0.0
  %990 = vmatpush1.msra.mxu0 0.0
  %991 = vmatprep.subr.mxu0 0.0
  %992 = vmatpush1.msra.mxu0 0.0
  %993 = vmatprep.subr.mxu0 0.0
  %994 = vmatpush1.msra.mxu0 0.0
  %995 = vmatprep.subr.mxu0 0.0
  %996 = vmatpush1.msra.mxu0 0.0
  %997 = vmatprep.subr.mxu0 0.0
  %998 = vmatpush1.msra.mxu0 0.0
  %999 = vmatprep.subr.mxu0 0.0
  %1000 = vmatpush1.msra.mxu0 0.0
  %1001 = vmatprep.subr.mxu0 0.0
  %1002 = vmatpush1.msra.mxu0 0.0
  %1003 = vmatprep.subr.mxu0 0.0
  %1004 = vmatpush1.msra.mxu0 0.0
  %1005 = vmatprep.subr.mxu0 0.0
  %1006 = vmatpush1.msra.mxu0 0.0
  %1007 = vmatprep.subr.mxu0 0.0
  %1008 = vmatpush1.msra.mxu0 0.0
  %1009 = vmatprep.subr.mxu0 0.0
  %1010 = vmatpush1.msra.mxu0 0.0
  %1011 = vmatprep.subr.mxu0 0.0
  %1012 = vmatpush1.msra.mxu0 0.0
  %1013 = vmatprep.subr.mxu0 0.0
  %1014 = vmatpush1.msra.mxu0 0.0
  %1015 = vmatprep.subr.mxu0 0.0
  %1016 = vmatpush1.msra.mxu0 0.0
  %1017 = vmatprep.subr.mxu0 0.0
  %1018 = vmatpush1.msra.mxu0 0.0
  %1019 = vmatprep.subr.mxu0 0.0
  %1020 = vmatpush1.msra.mxu0 0.0
  %1021 = vmatprep.subr.mxu0 0.0
  %1022 = vmatpush1.msra.mxu0 0.0
  %1023 = vmatprep.subr.mxu0 0.0
  %1024 = vmatpush1.msra.mxu0 0.0
  %1025 = vmatprep.subr.mxu0 0.0
  %1026 = vmatpush1.msra.mxu0 0.0
  %1027 = vmatprep.subr.mxu0 0.0
  %1028 = vmatpush1.msra.mxu0 0.0
  %1029 = vmatprep.subr.mxu0 0.0
  %1030 = vmatpush1.msra.mxu0 0.0
  %1031 = vmatprep.subr.mxu0 0.0
  %1032 = vmatpush1.msra.mxu0 0.0
  %1033 = vmatprep.mubr.f32.mxu0 0.0
  %1034 = vmatmul.mubr.f32.gmra.mrb[0].mxu0 %v965
  %v1035 = vpop.f32.mrb[0].mxu0
  %v1036 = vadd.f32 0.0, %v1035
  %v1037 = vpop.f32.mrb[0].mxu0
  %1038 = vmatprep.mubr.f32.mxu0 0.0
  %1039 = vmatmul.mubr.f32.gmra.mrb[0].mxu0 %v967
  %v1040 = vpop.f32.mrb[0].mxu0
  %v1041 = vadd.f32 0.0, %v1040
  %v1042 = vpop.f32.mrb[0].mxu0
  %1043 = vdwg.mxu0
  %v1044 = vadd.f32 %v474, %v1036
  %v1045 = vadd.f32 %v479, %v1041
  %v1046 = vxor.u32 %v1044, 2147483648
  %v1047 = vxor.u32 %v1045, 2147483648
  %v1048 = vmul.f32 %v1046, 1.442695
  %v1049 = vpow.pop %v1048
  %v1050 = vmul.f32 %v1047, 1.442695
  %v1051 = vpow.pop %v1050
  %v1052 = vadd.f32 %v1049, 1.0
  %v1053 = vadd.f32 %v1051, 1.0
  %v1054 = vrcp.pop %v1052
  %v1055 = vmul.f32 1.0, %v1054
  %v1056 = vrcp.pop %v1053
  %v1057 = vmul.f32 1.0, %v1056
  %v1058 = vtanh.pop %v1044
  %v1059 = vtanh.pop %v1045
  %v1060 = vmul.f32 %v1055, %v932
  %v1061 = vmul.f32 %v1057, %v933
  %1064 = vrot.lane.b32.xlu0 %v1058, 64
  %v1065 = vpop.permute.xlu0 %1064
  %1066 = vrot.lane.b32.xlu0 %v1059, 64
  %v1067 = vpop.permute.xlu0 %1066
  %v1070 = vmul.f32 %v1055, %v1065
  %v1071 = vmul.f32 %v1057, %v1067
  %1074 = vrot.lane.b32.xlu0 %v1070, 96
  %v1075 = vpop.permute.xlu0 %1074
  %1076 = vrot.lane.b32.xlu0 %v1071, 96
  %v1077 = vpop.permute.xlu0 %1076
  %v1080 = vadd.f32 %v1060, %v1075
  %v1081 = vadd.f32 %v1061, %v1077
  %v1082 = vtanh.pop %v1080
  %v1083 = vtanh.pop %v1081
  %1086 = vrot.lane.b32.xlu0 %v1082, 64
  %v1087 = vpop.permute.xlu0 %1086
  %1088 = vrot.lane.b32.xlu0 %v1083, 64
  %v1089 = vpop.permute.xlu0 %1088
  %v1092 = vmul.f32 %v1055, %v1087
  %v1093 = vmul.f32 %v1057, %v1089
  %1096 = vrot.lane.b32.xlu0 %v1092, 32
  %v1097 = vpop.permute.xlu0 %1096
  %1098 = vrot.lane.b32.xlu0 %v1093, 32
  %v1099 = vpop.permute.xlu0 %1098
  %vm1102 = vcmask 1048320
  %1103 = vst.msk [vmem:[%s7] sm:$0xff] %vm1102, %v1097
  %1104 = vst.msk [vmem:[%s7 + $0x10] sm:$0xff] %vm1102, %v1099
  %1107 = vrot.lane.b32.xlu0 %v1080, 96
  %v1108 = vpop.permute.xlu0 %1107
  %1109 = vrot.lane.b32.xlu0 %v1081, 96
  %v1110 = vpop.permute.xlu0 %1109
  %1113 = vst.msk [vmem:[%s8] sm:$0xff] %vm1102, %v1108
  %1114 = vst.msk [vmem:[%s8 + $0x10] sm:$0xff] %vm1102, %v1110
  %1115 = vrot.lane.b32.xlu0 %v1092, 64
  %v1116 = vpop.permute.xlu0 %1115
  %1117 = vrot.lane.b32.xlu0 %v1093, 64
  %v1118 = vpop.permute.xlu0 %1117
  %v1119 = vsel %vm522, %v1116, 0
  %v1121 = vsel %vm522, %v1118, 0
  %1123 = vmatprep.subr.mxu0 0.0
  %1124 = vmatpush1.msra.mxu0 %v29
  %1125 = vmatprep.subr.mxu0 0.0
  %1126 = vmatpush1.msra.mxu0 %v30
  %1127 = vmatprep.subr.mxu0 0.0
  %1128 = vmatpush1.msra.mxu0 %v31
  %1129 = vmatprep.subr.mxu0 0.0
  %1130 = vmatpush1.msra.mxu0 %v32
  %1131 = vmatprep.subr.mxu0 0.0
  %1132 = vmatpush1.msra.mxu0 0.0
  %1133 = vmatprep.subr.mxu0 0.0
  %1134 = vmatpush1.msra.mxu0 0.0
  %1135 = vmatprep.subr.mxu0 0.0
  %1136 = vmatpush1.msra.mxu0 0.0
  %1137 = vmatprep.subr.mxu0 0.0
  %1138 = vmatpush1.msra.mxu0 0.0
  %1139 = vmatprep.subr.mxu0 0.0
  %1140 = vmatpush1.msra.mxu0 0.0
  %1141 = vmatprep.subr.mxu0 0.0
  %1142 = vmatpush1.msra.mxu0 0.0
  %1143 = vmatprep.subr.mxu0 0.0
  %1144 = vmatpush1.msra.mxu0 0.0
  %1145 = vmatprep.subr.mxu0 0.0
  %1146 = vmatpush1.msra.mxu0 0.0
  %1147 = vmatprep.subr.mxu0 0.0
  %1148 = vmatpush1.msra.mxu0 0.0
  %1149 = vmatprep.subr.mxu0 0.0
  %1150 = vmatpush1.msra.mxu0 0.0
  %1151 = vmatprep.subr.mxu0 0.0
  %1152 = vmatpush1.msra.mxu0 0.0
  %1153 = vmatprep.subr.mxu0 0.0
  %1154 = vmatpush1.msra.mxu0 0.0
  %1155 = vmatprep.subr.mxu0 0.0
  %1156 = vmatpush1.msra.mxu0 0.0
  %1157 = vmatprep.subr.mxu0 0.0
  %1158 = vmatpush1.msra.mxu0 0.0
  %1159 = vmatprep.subr.mxu0 0.0
  %1160 = vmatpush1.msra.mxu0 0.0
  %1161 = vmatprep.subr.mxu0 0.0
  %1162 = vmatpush1.msra.mxu0 0.0
  %1163 = vmatprep.subr.mxu0 0.0
  %1164 = vmatpush1.msra.mxu0 0.0
  %1165 = vmatprep.subr.mxu0 0.0
  %1166 = vmatpush1.msra.mxu0 0.0
  %1167 = vmatprep.subr.mxu0 0.0
  %1168 = vmatpush1.msra.mxu0 0.0
  %1169 = vmatprep.subr.mxu0 0.0
  %1170 = vmatpush1.msra.mxu0 0.0
  %1171 = vmatprep.subr.mxu0 0.0
  %1172 = vmatpush1.msra.mxu0 0.0
  %1173 = vmatprep.subr.mxu0 0.0
  %1174 = vmatpush1.msra.mxu0 0.0
  %1175 = vmatprep.subr.mxu0 0.0
  %1176 = vmatpush1.msra.mxu0 0.0
  %1177 = vmatprep.subr.mxu0 0.0
  %1178 = vmatpush1.msra.mxu0 0.0
  %1179 = vmatprep.subr.mxu0 0.0
  %1180 = vmatpush1.msra.mxu0 0.0
  %1181 = vmatprep.subr.mxu0 0.0
  %1182 = vmatpush1.msra.mxu0 0.0
  %1183 = vmatprep.subr.mxu0 0.0
  %1184 = vmatpush1.msra.mxu0 0.0
  %1185 = vmatprep.subr.mxu0 0.0
  %1186 = vmatpush1.msra.mxu0 0.0
  %1187 = vmatprep.mubr.f32.mxu0 0.0
  %1188 = vmatmul.mubr.f32.gmra.mrb[0].mxu0 %v1119
  %v1189 = vpop.f32.mrb[0].mxu0
  %v1190 = vadd.f32 0.0, %v1189
  %v1191 = vpop.f32.mrb[0].mxu0
  %1192 = vmatprep.mubr.f32.mxu0 0.0
  %1193 = vmatmul.mubr.f32.gmra.mrb[0].mxu0 %v1121
  %v1194 = vpop.f32.mrb[0].mxu0
  %v1195 = vadd.f32 0.0, %v1194
  %v1196 = vpop.f32.mrb[0].mxu0
  %1197 = vdwg.mxu0
  %v1198 = vadd.f32 %v484, %v1190
  %v1199 = vadd.f32 %v489, %v1195
  %v1200 = vxor.u32 %v1198, 2147483648
  %v1201 = vxor.u32 %v1199, 2147483648
  %v1202 = vmul.f32 %v1200, 1.442695
  %v1203 = vpow.pop %v1202
  %v1204 = vmul.f32 %v1201, 1.442695
  %v1205 = vpow.pop %v1204
  %v1206 = vadd.f32 %v1203, 1.0
  %v1207 = vadd.f32 %v1205, 1.0
  %v1208 = vrcp.pop %v1206
  %v1209 = vmul.f32 1.0, %v1208
  %v1210 = vrcp.pop %v1207
  %v1211 = vmul.f32 1.0, %v1210
  %v1212 = vtanh.pop %v1198
  %v1213 = vtanh.pop %v1199
  %v1214 = vmul.f32 %v1209, %v1080
  %v1215 = vmul.f32 %v1211, %v1081
  %1218 = vrot.lane.b32.xlu0 %v1212, 64
  %v1219 = vpop.permute.xlu0 %1218
  %1220 = vrot.lane.b32.xlu0 %v1213, 64
  %v1221 = vpop.permute.xlu0 %1220
  %v1224 = vmul.f32 %v1209, %v1219
  %v1225 = vmul.f32 %v1211, %v1221
  %1228 = vrot.lane.b32.xlu0 %v1224, 96
  %v1229 = vpop.permute.xlu0 %1228
  %1230 = vrot.lane.b32.xlu0 %v1225, 96
  %v1231 = vpop.permute.xlu0 %1230
  %v1234 = vadd.f32 %v1214, %v1229
  %v1235 = vadd.f32 %v1215, %v1231
  %v1236 = vtanh.pop %v1234
  %v1237 = vtanh.pop %v1235
  %1240 = vrot.lane.b32.xlu0 %v1236, 64
  %v1241 = vpop.permute.xlu0 %1240
  %1242 = vrot.lane.b32.xlu0 %v1237, 64
  %v1243 = vpop.permute.xlu0 %1242
  %v1246 = vmul.f32 %v1209, %v1241
  %v1247 = vmul.f32 %v1211, %v1243
  %1250 = vrot.lane.b32.xlu0 %v1246, 64
  %v1251 = vpop.permute.xlu0 %1250
  %1252 = vrot.lane.b32.xlu0 %v1247, 64
  %v1253 = vpop.permute.xlu0 %1252
  %1256 = vst.msk [vmem:[%s7 + $0x8] sm:$0xff] %vm522, %v1251
  %1257 = vst.msk [vmem:[%s7 + $0x18] sm:$0xff] %vm522, %v1253
  %1258 = vst.msk [vmem:[%s8 + $0x8] sm:$0xff] %vm522, %v1234
  %1259 = vst.msk [vmem:[%s8 + $0x18] sm:$0xff] %vm522, %v1235
  %v1260 = vsel %vm522, %v1251, 0
  %v1262 = vsel %vm522, %v1253, 0
  %1264 = vmatprep.subr.mxu0 0.0
  %1265 = vmatpush1.msra.mxu0 %v29
  %1266 = vmatprep.subr.mxu0 0.0
  %1267 = vmatpush1.msra.mxu0 %v30
  %1268 = vmatprep.subr.mxu0 0.0
  %1269 = vmatpush1.msra.mxu0 %v31
  %1270 = vmatprep.subr.mxu0 0.0
  %1271 = vmatpush1.msra.mxu0 %v32
  %1272 = vmatprep.subr.mxu0 0.0
  %1273 = vmatpush1.msra.mxu0 0.0
  %1274 = vmatprep.subr.mxu0 0.0
  %1275 = vmatpush1.msra.mxu0 0.0
  %1276 = vmatprep.subr.mxu0 0.0
  %1277 = vmatpush1.msra.mxu0 0.0
  %1278 = vmatprep.subr.mxu0 0.0
  %1279 = vmatpush1.msra.mxu0 0.0
  %1280 = vmatprep.subr.mxu0 0.0
  %1281 = vmatpush1.msra.mxu0 0.0
  %1282 = vmatprep.subr.mxu0 0.0
  %1283 = vmatpush1.msra.mxu0 0.0
  %1284 = vmatprep.subr.mxu0 0.0
  %1285 = vmatpush1.msra.mxu0 0.0
  %1286 = vmatprep.subr.mxu0 0.0
  %1287 = vmatpush1.msra.mxu0 0.0
  %1288 = vmatprep.subr.mxu0 0.0
  %1289 = vmatpush1.msra.mxu0 0.0
  %1290 = vmatprep.subr.mxu0 0.0
  %1291 = vmatpush1.msra.mxu0 0.0
  %1292 = vmatprep.subr.mxu0 0.0
  %1293 = vmatpush1.msra.mxu0 0.0
  %1294 = vmatprep.subr.mxu0 0.0
  %1295 = vmatpush1.msra.mxu0 0.0
  %1296 = vmatprep.subr.mxu0 0.0
  %1297 = vmatpush1.msra.mxu0 0.0
  %1298 = vmatprep.subr.mxu0 0.0
  %1299 = vmatpush1.msra.mxu0 0.0
  %1300 = vmatprep.subr.mxu0 0.0
  %1301 = vmatpush1.msra.mxu0 0.0
  %1302 = vmatprep.subr.mxu0 0.0
  %1303 = vmatpush1.msra.mxu0 0.0
  %1304 = vmatprep.subr.mxu0 0.0
  %1305 = vmatpush1.msra.mxu0 0.0
  %1306 = vmatprep.subr.mxu0 0.0
  %1307 = vmatpush1.msra.mxu0 0.0
  %1308 = vmatprep.subr.mxu0 0.0
  %1309 = vmatpush1.msra.mxu0 0.0
  %1310 = vmatprep.subr.mxu0 0.0
  %1311 = vmatpush1.msra.mxu0 0.0
  %1312 = vmatprep.subr.mxu0 0.0
  %1313 = vmatpush1.msra.mxu0 0.0
  %1314 = vmatprep.subr.mxu0 0.0
  %1315 = vmatpush1.msra.mxu0 0.0
  %1316 = vmatprep.subr.mxu0 0.0
  %1317 = vmatpush1.msra.mxu0 0.0
  %1318 = vmatprep.subr.mxu0 0.0
  %1319 = vmatpush1.msra.mxu0 0.0
  %1320 = vmatprep.subr.mxu0 0.0
  %1321 = vmatpush1.msra.mxu0 0.0
  %1322 = vmatprep.subr.mxu0 0.0
  %1323 = vmatpush1.msra.mxu0 0.0
  %1324 = vmatprep.subr.mxu0 0.0
  %1325 = vmatpush1.msra.mxu0 0.0
  %1326 = vmatprep.subr.mxu0 0.0
  %1327 = vmatpush1.msra.mxu0 0.0
  %1328 = vmatprep.mubr.f32.mxu0 0.0
  %1329 = vmatmul.mubr.f32.gmra.mrb[0].mxu0 %v1260
  %v1330 = vpop.f32.mrb[0].mxu0
  %v1331 = vadd.f32 0.0, %v1330
  %v1332 = vpop.f32.mrb[0].mxu0
  %1333 = vmatprep.mubr.f32.mxu0 0.0
  %1334 = vmatmul.mubr.f32.gmra.mrb[0].mxu0 %v1262
  %v1335 = vpop.f32.mrb[0].mxu0
  %v1336 = vadd.f32 0.0, %v1335
  %v1337 = vpop.f32.mrb[0].mxu0
  %1338 = vdwg.mxu0
  %v1339 = vadd.f32 %v494, %v1331
  %v1340 = vadd.f32 %v499, %v1336
  %v1341 = vxor.u32 %v1339, 2147483648
  %v1342 = vxor.u32 %v1340, 2147483648
  %v1343 = vmul.f32 %v1341, 1.442695
  %v1344 = vpow.pop %v1343
  %v1345 = vmul.f32 %v1342, 1.442695
  %v1346 = vpow.pop %v1345
  %v1347 = vadd.f32 %v1344, 1.0
  %v1348 = vadd.f32 %v1346, 1.0
  %v1349 = vrcp.pop %v1347
  %v1350 = vmul.f32 1.0, %v1349
  %v1351 = vrcp.pop %v1348
  %v1352 = vmul.f32 1.0, %v1351
  %v1353 = vtanh.pop %v1339
  %v1354 = vtanh.pop %v1340
  %v1355 = vmul.f32 %v1350, %v1234
  %v1356 = vmul.f32 %v1352, %v1235
  %1359 = vrot.lane.b32.xlu0 %v1353, 64
  %v1360 = vpop.permute.xlu0 %1359
  %1361 = vrot.lane.b32.xlu0 %v1354, 64
  %v1362 = vpop.permute.xlu0 %1361
  %v1365 = vmul.f32 %v1350, %v1360
  %v1366 = vmul.f32 %v1352, %v1362
  %1369 = vrot.lane.b32.xlu0 %v1365, 96
  %v1370 = vpop.permute.xlu0 %1369
  %1371 = vrot.lane.b32.xlu0 %v1366, 96
  %v1372 = vpop.permute.xlu0 %1371
  %v1375 = vadd.f32 %v1355, %v1370
  %v1376 = vadd.f32 %v1356, %v1372
  %v1377 = vtanh.pop %v1375
  %v1378 = vtanh.pop %v1376
  %1381 = vrot.lane.b32.xlu0 %v1377, 64
  %v1382 = vpop.permute.xlu0 %1381
  %1383 = vrot.lane.b32.xlu0 %v1378, 64
  %v1384 = vpop.permute.xlu0 %1383
  %v1387 = vmul.f32 %v1350, %v1382
  %v1388 = vmul.f32 %v1352, %v1384
  %1391 = vrot.lane.b32.xlu0 %v1387, 96
  %v1392 = vpop.permute.xlu0 %1391
  %1393 = vrot.lane.b32.xlu0 %v1388, 96
  %v1394 = vpop.permute.xlu0 %1393
  %1397 = vst.msk [vmem:[%s7 + $0x8] sm:$0xff] %vm800, %v1392
  %1398 = vst.msk [vmem:[%s7 + $0x18] sm:$0xff] %vm800, %v1394
  %1401 = vrot.lane.b32.xlu0 %v1375, 32
  %v1402 = vpop.permute.xlu0 %1401
  %1403 = vrot.lane.b32.xlu0 %v1376, 32
  %v1404 = vpop.permute.xlu0 %1403
  %1407 = vst.msk [vmem:[%s8 + $0x8] sm:$0xff] %vm800, %v1402
  %1408 = vst.msk [vmem:[%s8 + $0x18] sm:$0xff] %vm800, %v1404
  %1409 = vrot.lane.b32.xlu0 %v1387, 64
  %v1410 = vpop.permute.xlu0 %1409
  %1411 = vrot.lane.b32.xlu0 %v1388, 64
  %v1412 = vpop.permute.xlu0 %1411
  %v1413 = vsel %vm522, %v1410, 0
  %v1415 = vsel %vm522, %v1412, 0
  %1417 = vmatprep.subr.mxu0 0.0
  %1418 = vmatpush1.msra.mxu0 %v29
  %1419 = vmatprep.subr.mxu0 0.0
  %1420 = vmatpush1.msra.mxu0 %v30
  %1421 = vmatprep.subr.mxu0 0.0
  %1422 = vmatpush1.msra.mxu0 %v31
  %1423 = vmatprep.subr.mxu0 0.0
  %1424 = vmatpush1.msra.mxu0 %v32
  %1425 = vmatprep.subr.mxu0 0.0
  %1426 = vmatpush1.msra.mxu0 0.0
  %1427 = vmatprep.subr.mxu0 0.0
  %1428 = vmatpush1.msra.mxu0 0.0
  %1429 = vmatprep.subr.mxu0 0.0
  %1430 = vmatpush1.msra.mxu0 0.0
  %1431 = vmatprep.subr.mxu0 0.0
  %1432 = vmatpush1.msra.mxu0 0.0
  %1433 = vmatprep.subr.mxu0 0.0
  %1434 = vmatpush1.msra.mxu0 0.0
  %1435 = vmatprep.subr.mxu0 0.0
  %1436 = vmatpush1.msra.mxu0 0.0
  %1437 = vmatprep.subr.mxu0 0.0
  %1438 = vmatpush1.msra.mxu0 0.0
  %1439 = vmatprep.subr.mxu0 0.0
  %1440 = vmatpush1.msra.mxu0 0.0
  %1441 = vmatprep.subr.mxu0 0.0
  %1442 = vmatpush1.msra.mxu0 0.0
  %1443 = vmatprep.subr.mxu0 0.0
  %1444 = vmatpush1.msra.mxu0 0.0
  %1445 = vmatprep.subr.mxu0 0.0
  %1446 = vmatpush1.msra.mxu0 0.0
  %1447 = vmatprep.subr.mxu0 0.0
  %1448 = vmatpush1.msra.mxu0 0.0
  %1449 = vmatprep.subr.mxu0 0.0
  %1450 = vmatpush1.msra.mxu0 0.0
  %1451 = vmatprep.subr.mxu0 0.0
  %1452 = vmatpush1.msra.mxu0 0.0
  %1453 = vmatprep.subr.mxu0 0.0
  %1454 = vmatpush1.msra.mxu0 0.0
  %1455 = vmatprep.subr.mxu0 0.0
  %1456 = vmatpush1.msra.mxu0 0.0
  %1457 = vmatprep.subr.mxu0 0.0
  %1458 = vmatpush1.msra.mxu0 0.0
  %1459 = vmatprep.subr.mxu0 0.0
  %1460 = vmatpush1.msra.mxu0 0.0
  %1461 = vmatprep.subr.mxu0 0.0
  %1462 = vmatpush1.msra.mxu0 0.0
  %1463 = vmatprep.subr.mxu0 0.0
  %1464 = vmatpush1.msra.mxu0 0.0
  %1465 = vmatprep.subr.mxu0 0.0
  %1466 = vmatpush1.msra.mxu0 0.0
  %1467 = vmatprep.subr.mxu0 0.0
  %1468 = vmatpush1.msra.mxu0 0.0
  %1469 = vmatprep.subr.mxu0 0.0
  %1470 = vmatpush1.msra.mxu0 0.0
  %1471 = vmatprep.subr.mxu0 0.0
  %1472 = vmatpush1.msra.mxu0 0.0
  %1473 = vmatprep.subr.mxu0 0.0
  %1474 = vmatpush1.msra.mxu0 0.0
  %1475 = vmatprep.subr.mxu0 0.0
  %1476 = vmatpush1.msra.mxu0 0.0
  %1477 = vmatprep.subr.mxu0 0.0
  %1478 = vmatpush1.msra.mxu0 0.0
  %1479 = vmatprep.subr.mxu0 0.0
  %1480 = vmatpush1.msra.mxu0 0.0
  %1481 = vmatprep.mubr.f32.mxu0 0.0
  %1482 = vmatmul.mubr.f32.gmra.mrb[0].mxu0 %v1413
  %v1483 = vpop.f32.mrb[0].mxu0
  %v1484 = vadd.f32 0.0, %v1483
  %v1485 = vpop.f32.mrb[0].mxu0
  %1486 = vmatprep.mubr.f32.mxu0 0.0
  %1487 = vmatmul.mubr.f32.gmra.mrb[0].mxu0 %v1415
  %v1488 = vpop.f32.mrb[0].mxu0
  %v1489 = vadd.f32 0.0, %v1488
  %v1490 = vpop.f32.mrb[0].mxu0
  %1491 = vdwg.mxu0
  %v1492 = vadd.f32 %v504, %v1484
  %v1493 = vadd.f32 %v509, %v1489
  %v1494 = vxor.u32 %v1492, 2147483648
  %v1495 = vxor.u32 %v1493, 2147483648
  %v1496 = vmul.f32 %v1494, 1.442695
  %v1497 = vpow.pop %v1496
  %v1498 = vmul.f32 %v1495, 1.442695
  %v1499 = vpow.pop %v1498
  %v1500 = vadd.f32 %v1497, 1.0
  %v1501 = vadd.f32 %v1499, 1.0
  %v1502 = vrcp.pop %v1500
  %v1503 = vmul.f32 1.0, %v1502
  %v1504 = vrcp.pop %v1501
  %v1505 = vmul.f32 1.0, %v1504
  %v1506 = vtanh.pop %v1492
  %v1507 = vtanh.pop %v1493
  %v1508 = vmul.f32 %v1503, %v1375
  %v1509 = vmul.f32 %v1505, %v1376
  %1512 = vrot.lane.b32.xlu0 %v1506, 64
  %v1513 = vpop.permute.xlu0 %1512
  %1514 = vrot.lane.b32.xlu0 %v1507, 64
  %v1515 = vpop.permute.xlu0 %1514
  %v1518 = vmul.f32 %v1503, %v1513
  %v1519 = vmul.f32 %v1505, %v1515
  %1522 = vrot.lane.b32.xlu0 %v1518, 96
  %v1523 = vpop.permute.xlu0 %1522
  %1524 = vrot.lane.b32.xlu0 %v1519, 96
  %v1525 = vpop.permute.xlu0 %1524
  %v1528 = vadd.f32 %v1508, %v1523
  %v1529 = vadd.f32 %v1509, %v1525
  %v1530 = vtanh.pop %v1528
  %v1531 = vtanh.pop %v1529
  %1534 = vrot.lane.b32.xlu0 %v1530, 64
  %v1535 = vpop.permute.xlu0 %1534
  %1536 = vrot.lane.b32.xlu0 %v1531, 64
  %v1537 = vpop.permute.xlu0 %1536
  %v1540 = vmul.f32 %v1503, %v1535
  %v1541 = vmul.f32 %v1505, %v1537
  %1542 = vst.msk [vmem:[%s7 + $0x8] sm:$0xff] %vm946, %v1540
  %1543 = vst.msk [vmem:[%s7 + $0x18] sm:$0xff] %vm946, %v1541
  %1546 = vrot.lane.b32.xlu0 %v1528, 64
  %v1547 = vpop.permute.xlu0 %1546
  %1548 = vrot.lane.b32.xlu0 %v1529, 64
  %v1549 = vpop.permute.xlu0 %1548
  %1552 = vst.msk [vmem:[%s8 + $0x8] sm:$0xff] %vm946, %v1547
  %1553 = vst.msk [vmem:[%s8 + $0x18] sm:$0xff] %vm946, %v1549
  %1556 = vrot.lane.b32.xlu0 %v1540, 64
  %v1557 = vpop.permute.xlu0 %1556
  %1558 = vrot.lane.b32.xlu0 %v1541, 64
  %v1559 = vpop.permute.xlu0 %1558
  %v1560 = vsel %vm522, %v1557, 0
  %v1562 = vsel %vm522, %v1559, 0
  %1564 = vmatprep.subr.mxu0 0.0
  %1565 = vmatpush1.msra.mxu0 %v29
  %1566 = vmatprep.subr.mxu0 0.0
  %1567 = vmatpush1.msra.mxu0 %v30
  %1568 = vmatprep.subr.mxu0 0.0
  %1569 = vmatpush1.msra.mxu0 %v31
  %1570 = vmatprep.subr.mxu0 0.0
  %1571 = vmatpush1.msra.mxu0 %v32
  %1572 = vmatprep.subr.mxu0 0.0
  %1573 = vmatpush1.msra.mxu0 0.0
  %1574 = vmatprep.subr.mxu0 0.0
  %1575 = vmatpush1.msra.mxu0 0.0
  %1576 = vmatprep.subr.mxu0 0.0
  %1577 = vmatpush1.msra.mxu0 0.0
  %1578 = vmatprep.subr.mxu0 0.0
  %1579 = vmatpush1.msra.mxu0 0.0
  %1580 = vmatprep.subr.mxu0 0.0
  %1581 = vmatpush1.msra.mxu0 0.0
  %1582 = vmatprep.subr.mxu0 0.0
  %1583 = vmatpush1.msra.mxu0 0.0
  %1584 = vmatprep.subr.mxu0 0.0
  %1585 = vmatpush1.msra.mxu0 0.0
  %1586 = vmatprep.subr.mxu0 0.0
  %1587 = vmatpush1.msra.mxu0 0.0
  %1588 = vmatprep.subr.mxu0 0.0
  %1589 = vmatpush1.msra.mxu0 0.0
  %1590 = vmatprep.subr.mxu0 0.0
  %1591 = vmatpush1.msra.mxu0 0.0
  %1592 = vmatprep.subr.mxu0 0.0
  %1593 = vmatpush1.msra.mxu0 0.0
  %1594 = vmatprep.subr.mxu0 0.0
  %1595 = vmatpush1.msra.mxu0 0.0
  %1596 = vmatprep.subr.mxu0 0.0
  %1597 = vmatpush1.msra.mxu0 0.0
  %1598 = vmatprep.subr.mxu0 0.0
  %1599 = vmatpush1.msra.mxu0 0.0
  %1600 = vmatprep.subr.mxu0 0.0
  %1601 = vmatpush1.msra.mxu0 0.0
  %1602 = vmatprep.subr.mxu0 0.0
  %1603 = vmatpush1.msra.mxu0 0.0
  %1604 = vmatprep.subr.mxu0 0.0
  %1605 = vmatpush1.msra.mxu0 0.0
  %1606 = vmatprep.subr.mxu0 0.0
  %1607 = vmatpush1.msra.mxu0 0.0
  %1608 = vmatprep.subr.mxu0 0.0
  %1609 = vmatpush1.msra.mxu0 0.0
  %1610 = vmatprep.subr.mxu0 0.0
  %1611 = vmatpush1.msra.mxu0 0.0
  %1612 = vmatprep.subr.mxu0 0.0
  %1613 = vmatpush1.msra.mxu0 0.0
  %1614 = vmatprep.subr.mxu0 0.0
  %1615 = vmatpush1.msra.mxu0 0.0
  %1616 = vmatprep.subr.mxu0 0.0
  %1617 = vmatpush1.msra.mxu0 0.0
  %1618 = vmatprep.subr.mxu0 0.0
  %1619 = vmatpush1.msra.mxu0 0.0
  %1620 = vmatprep.subr.mxu0 0.0
  %1621 = vmatpush1.msra.mxu0 0.0
  %1622 = vmatprep.subr.mxu0 0.0
  %1623 = vmatpush1.msra.mxu0 0.0
  %1624 = vmatprep.subr.mxu0 0.0
  %1625 = vmatpush1.msra.mxu0 0.0
  %1626 = vmatprep.subr.mxu0 0.0
  %1627 = vmatpush1.msra.mxu0 0.0
  %1628 = vmatprep.mubr.f32.mxu0 0.0
  %1629 = vmatmul.mubr.f32.gmra.mrb[0].mxu0 %v1560
  %v1630 = vpop.f32.mrb[0].mxu0
  %v1631 = vadd.f32 0.0, %v1630
  %v1632 = vpop.f32.mrb[0].mxu0
  %1633 = vmatprep.mubr.f32.mxu0 0.0
  %1634 = vmatmul.mubr.f32.gmra.mrb[0].mxu0 %v1562
  %v1635 = vpop.f32.mrb[0].mxu0
  %v1636 = vadd.f32 0.0, %v1635
  %v1637 = vpop.f32.mrb[0].mxu0
  %1638 = vdwg.mxu0
  %v1639 = vadd.f32 %v514, %v1631
  %v1640 = vadd.f32 %v519, %v1636
  %v1641 = vxor.u32 %v1639, 2147483648
  %v1642 = vxor.u32 %v1640, 2147483648
  %v1643 = vmul.f32 %v1641, 1.442695
  %v1644 = vpow.pop %v1643
  %v1645 = vmul.f32 %v1642, 1.442695
  %v1646 = vpow.pop %v1645
  %v1647 = vadd.f32 %v1644, 1.0
  %v1648 = vadd.f32 %v1646, 1.0
  %v1649 = vrcp.pop %v1647
  %v1650 = vmul.f32 1.0, %v1649
  %v1651 = vrcp.pop %v1648
  %v1652 = vmul.f32 1.0, %v1651
  %v1653 = vtanh.pop %v1639
  %v1654 = vtanh.pop %v1640
  %v1655 = vmul.f32 %v1650, %v1528
  %v1656 = vmul.f32 %v1652, %v1529
  %1659 = vrot.lane.b32.xlu0 %v1653, 64
  %v1660 = vpop.permute.xlu0 %1659
  %1661 = vrot.lane.b32.xlu0 %v1654, 64
  %v1662 = vpop.permute.xlu0 %1661
  %v1665 = vmul.f32 %v1650, %v1660
  %v1666 = vmul.f32 %v1652, %v1662
  %1669 = vrot.lane.b32.xlu0 %v1665, 96
  %v1670 = vpop.permute.xlu0 %1669
  %1671 = vrot.lane.b32.xlu0 %v1666, 96
  %v1672 = vpop.permute.xlu0 %1671
  %v1675 = vadd.f32 %v1655, %v1670
  %v1676 = vadd.f32 %v1656, %v1672
  %v1677 = vtanh.pop %v1675
  %v1678 = vtanh.pop %v1676
  %1681 = vrot.lane.b32.xlu0 %v1677, 64
  %v1682 = vpop.permute.xlu0 %1681
  %1683 = vrot.lane.b32.xlu0 %v1678, 64
  %v1684 = vpop.permute.xlu0 %1683
  %v1687 = vmul.f32 %v1650, %v1682
  %v1688 = vmul.f32 %v1652, %v1684
  %1691 = vrot.lane.b32.xlu0 %v1687, 32
  %v1692 = vpop.permute.xlu0 %1691
  %1693 = vrot.lane.b32.xlu0 %v1688, 32
  %v1694 = vpop.permute.xlu0 %1693
  %1697 = vst.msk [vmem:[%s7 + $0x8] sm:$0xff] %vm1102, %v1692
  %1698 = vst.msk [vmem:[%s7 + $0x18] sm:$0xff] %vm1102, %v1694
  %1701 = vrot.lane.b32.xlu0 %v1675, 96
  %v1702 = vpop.permute.xlu0 %1701
  %1703 = vrot.lane.b32.xlu0 %v1676, 96
  %v1704 = vpop.permute.xlu0 %1703
  %1707 = vst.msk [vmem:[%s8 + $0x8] sm:$0xff] %vm1102, %v1702
  %1708 = vst.msk [vmem:[%s8 + $0x18] sm:$0xff] %vm1102, %v1704
  %v1709 = vld [vmem:[%s4] sm:$0x1]
  %v1711 = vlaneseq
  %v1712 = vshrl.u32 %v1711, 7
  %v1713 = vsub.s32 0, %v1712
  %v1714 = vrot.slane %v1709, %v1713
  %1715 = vrot.lane.b32.xlu0 %v1714, 64
  %v1716 = vpop.permute.xlu0 %1715
  %v1718 = vmul.f32 %v1687, %v1716
  %v1719 = vmul.f32 %v1688, %v1716
  %1722 = vrot.lane.b32.xlu0 %v1718, 64
  %v1723 = vpop.permute.xlu0 %1722
  %1724 = vrot.lane.b32.xlu0 %v1719, 64
  %v1725 = vpop.permute.xlu0 %1724
  %v1728 = vsel %vm522, %v1723, 0.0
  %1729 = vadd.xlane.f32.xlu0 %v1728
  %v1730 = vpop.xlane.xlu0 %1729
  %v1731 = vsel %vm522, %v1725, 0.0
  %1732 = vadd.xlane.f32.xlu0 %v1731
  %v1733 = vpop.xlane.xlu0 %1732
  %v1734 = vld [vmem:[#allocation2] sm:$0x1]
  %v1736 = vlaneseq
  %v1737 = vshrl.u32 %v1736, 7
  %v1738 = vsub.s32 0, %v1737
  %v1739 = vrot.slane %v1734, %v1738
  %v1741 = vadd.f32 %v1730, %v1739
  %v1742 = vadd.f32 %v1733, %v1739
  %vm1743 = vcmask 7168
  %1744 = vst.msk [vmem:[%s6] sm:$0xff] %vm1743, %v1741
  %1745 = vst.msk [vmem:[%s6 + $0x8] sm:$0xff] %vm1743, %v1742
  // Predicated region
  $region26: #{model_forward.1} parent=0 // pred_check
    _
  $region27: #{model_forward.1} parent=0 // pred_check_branch
    %1747 = sbr.rel (0) target = $region29
  $region28: #{model_forward.1} parent=0 // pred_region
    _
  $region29: #{model_forward.1} parent=0 // pred_fallthru
    _
  // Predicated region
  $region30: #{model_forward.1} parent=0 // pred_check
    _
  $region31: #{model_forward.1} parent=0 // pred_check_branch
    %1749 = sbr.rel (0) target = $region33
  $region32: #{model_forward.1} parent=0 // pred_region
    _
  $region33: #{model_forward.1} parent=0 // pred_fallthru
    _
  // Predicated region
  $region34: #{model_forward.1} parent=0 // pred_check
    _
  $region35: #{model_forward.1} parent=0 // pred_check_branch
    %1751 = sbr.rel (0) target = $region37
  $region36: #{model_forward.1} parent=0 // pred_region
    _
  $region37: #{model_forward.1} parent=0 // pred_fallthru
    _
  // Predicated region
  $region38: #{model_forward.1} parent=0 // pred_check
    _
  $region39: #{model_forward.1} parent=0 // pred_check_branch
    %1753 = sbr.rel (0) target = $region41
  $region40: #{model_forward.1} parent=0 // pred_region
    _
  $region41: #{model_forward.1} parent=0 // pred_fallthru
    _
  // Predicated region
  $region42: #{model_forward.1} parent=0 // pred_check
    _
  $region43: #{model_forward.1} parent=0 // pred_check_branch
    %1755 = sbr.rel (0) target = $region45
  $region44: #{model_forward.1} parent=0 // pred_region
    _
  $region45: #{model_forward.1} parent=0 // pred_fallthru
    _
  // Predicated region
  $region46: #{model_forward.1} parent=0 // pred_check
    _
  $region47: #{model_forward.1} parent=0 // pred_check_branch
    %1757 = sbr.rel (0) target = $region49
  $region48: #{model_forward.1} parent=0 // pred_region
    _
  $region49: #{model_forward.1} parent=0 // pred_fallthru
    _

</llo_original>
